<compile_context>
chip_gen: v7x
topology: tpu7x:2x2x1
jax: 0.10.0
libtpu: 0.0.40
codegen_flags: <defaults>
</compile_context>

<pallas_src>
import functools

import jax
import jax.numpy as jnp
from jax.experimental import pallas as pl
from jax.experimental.pallas import tpu as pltpu

K_SIZE = 4
STRIDE = 2
PAD = 1
BN_EPS = 1e-5
LRELU_SLOPE = 0.2

VMEM_LIMIT = 32 * 1024 * 1024     # scoped-VMEM limit, safe on v5e/v6e/v7x
TILE_BUDGET = 8 * 1024 * 1024     # per-layer budget for double-buffered tiles
MAX_TILE_M = 16384
MIN_TILE_M = 512


# -------------------------------------------------------------------------
# Tile sizing: K-aware cap + divisor-preferring tile pick (avoids jnp.pad).
# -------------------------------------------------------------------------
def _tile_cap(k_dim, cout, out_bytes=2):
    """Max lanes per tile so 2x-buffered bf16 patches + outputs fit the budget."""
    per_col = 2 * k_dim * 2 + 2 * cout * out_bytes
    cap = TILE_BUDGET // max(per_col, 1)
    return max(MIN_TILE_M, min(MAX_TILE_M, (cap // 128) * 128))


def _pick_tile(m, cap):
    """Return (tile_m, padded_m). Prefer full block or a 128-multiple divisor."""
    if m <= cap:
        return m, m                          # single full-extent block, no pad
    t = (cap // 128) * 128
    while t >= 128:                          # try to divide m exactly -> no pad copy
        if m % t == 0:
            return t, m
        t -= 128
    tile = (cap // 128) * 128
    return tile, pl.cdiv(m, tile) * tile


# -------------------------------------------------------------------------
# Plain-JAX glue: im2col for k=4, s=2, p=1 convolutions, channel-first layout.
# x: (C, N, H, W) -> patches (C*16, M).  K ordering is C-major then (ki, kj),
# matching PyTorch weight.reshape(Cout, Cin*kH*kW).
# m_order "nhw": M = (n, ho, wo)   (default, feeds the next spatial layer)
# m_order "hwn": M = (ho, wo, n)   (used for conv3 so conv4 needs no im2col)
# -------------------------------------------------------------------------
def im2col_cnhw(x, *, m_order="nhw"):
    c, n, h, w = x.shape
    xp = jnp.pad(x, ((0, 0), (0, 0), (PAD, PAD), (PAD, PAD)))
    ho = (h + 2 * PAD - K_SIZE) // STRIDE + 1
    wo = (w + 2 * PAD - K_SIZE) // STRIDE + 1
    cols = []
    for i in range(K_SIZE):
        for j in range(K_SIZE):
            cols.append(xp[:, :, i:i + STRIDE * ho:STRIDE, j:j + STRIDE * wo:STRIDE])
    cols = jnp.stack(cols, axis=1)                        # (C, 16, N, Ho, Wo)
    if m_order == "hwn":
        cols = cols.transpose(0, 1, 3, 4, 2)              # (C, 16, Ho, Wo, N)
    return cols.reshape(c * K_SIZE * K_SIZE, n * ho * wo), ho, wo


# -------------------------------------------------------------------------
# Pallas kernels (lane-dense: output is (Cout, tile_m), M on the lane axis).
# -------------------------------------------------------------------------
def matmul_act_kernel(p_ref, w_ref, o_ref, *, act):
    # (Cout, K) @ (K, tile_m) -> (Cout, tile_m), f32 accumulation on the MXU.
    y = jnp.dot(w_ref[...], p_ref[...], preferred_element_type=jnp.float32)
    if act == "lrelu":
        y = jnp.where(y >= 0, y, LRELU_SLOPE * y)
    elif act == "sigmoid":
        # exp and approx reciprocal both land on the EUP slot.
        y = pl.reciprocal(1.0 + jnp.exp(-y), approx=True)
    o_ref[...] = y.astype(o_ref.dtype)


def conv_bn_act_kernel(p_ref, w_ref, g_ref, b_ref, o_ref,
                       y_ref, sum_ref, ssq_ref, *, m_total):
    """Two-phase grid (phase, M-tile).

    Phase 0: matmul each patch tile ONCE, stash the raw result in the
             persistent VMEM scratch y_ref[i], accumulate sum / sum-of-squares.
    Phase 1: read y_ref[i] back (no patch DMA, no recompute), normalize with
             the finalized batch stats + LeakyReLU, write the output tile.
    Zero-padded M columns produce zero conv outputs (bias-free), so the stats
    stay exact; m_total is the true (unpadded) column count.
    """
    phase = pl.program_id(0)
    i = pl.program_id(1)

    @pl.when(jnp.logical_and(phase == 0, i == 0))
    def _():
        sum_ref[...] = jnp.zeros_like(sum_ref)
        ssq_ref[...] = jnp.zeros_like(ssq_ref)

    @pl.when(phase == 0)
    def _():
        y = jnp.dot(w_ref[...], p_ref[...], preferred_element_type=jnp.float32)
        y_ref[i] = y.astype(y_ref.dtype)
        sum_ref[...] += jnp.sum(y, axis=1, keepdims=True)
        ssq_ref[...] += jnp.sum(y * y, axis=1, keepdims=True)

    @pl.when(phase == 1)
    def _():
        inv_m = 1.0 / m_total
        mean = sum_ref[...] * inv_m
        # Clamp: E[y^2] - mean^2 can go slightly negative from f32 cancellation.
        var = jnp.maximum(ssq_ref[...] * inv_m - mean * mean, 0.0)
        y = y_ref[i].astype(jnp.float32)
        yn = (y - mean) * jax.lax.rsqrt(var + BN_EPS) * g_ref[...] + b_ref[...]
        o_ref[...] = jnp.where(yn >= 0, yn, LRELU_SLOPE * yn).astype(o_ref.dtype)


# -------------------------------------------------------------------------
# Layer wrappers
# -------------------------------------------------------------------------
def matmul_act(p_mat, w_mat, *, act, out_dtype):
    """p_mat: (K, M) bf16; w_mat: (Cout, K) bf16 -> (Cout, M)."""
    cout, k_dim = w_mat.shape
    m = p_mat.shape[1]
    tile_m, m_pad = _pick_tile(m, _tile_cap(k_dim, cout))
    if m_pad != m:
        p_mat = jnp.pad(p_mat, ((0, 0), (0, m_pad - m)))
    y = pl.pallas_call(
        functools.partial(matmul_act_kernel, act=act),
        out_shape=jax.ShapeDtypeStruct((cout, m_pad), out_dtype),
        grid_spec=pltpu.PrefetchScalarGridSpec(
            num_scalar_prefetch=0,
            grid=(m_pad // tile_m,),
            in_specs=[pl.BlockSpec((k_dim, tile_m), lambda i: (0, i)),
                      pl.BlockSpec((cout, k_dim), lambda i: (0, 0))],
            out_specs=pl.BlockSpec((cout, tile_m), lambda i: (0, i))),
        compiler_params=pltpu.CompilerParams(
            dimension_semantics=("parallel",),
            vmem_limit_bytes=VMEM_LIMIT),
    )(p_mat, w_mat)
    if m_pad != m:
        y = y[:, :m]
    return y


def conv_bn_act(p_mat, w_mat, gamma, beta, *, out_dtype):
    """Conv + BatchNorm (batch stats) + LeakyReLU; patches streamed once."""
    cout, k_dim = w_mat.shape
    m = p_mat.shape[1]
    tile_m, m_pad = _pick_tile(m, _tile_cap(k_dim, cout))
    if m_pad != m:
        p_mat = jnp.pad(p_mat, ((0, 0), (0, m_pad - m)))
    n_m = m_pad // tile_m
    # Persistent raw-conv scratch: f32 when small, bf16 for very large batches
    # (keeps the resident footprint inside the v7x 64 MiB budget).
    y_dtype = jnp.float32 if cout * m_pad * 4 <= (8 << 20) else jnp.bfloat16

    y = pl.pallas_call(
        functools.partial(conv_bn_act_kernel, m_total=float(m)),
        out_shape=jax.ShapeDtypeStruct((cout, m_pad), out_dtype),
        grid_spec=pltpu.PrefetchScalarGridSpec(
            num_scalar_prefetch=0,
            grid=(2, n_m),                                  # (phase, M-tiles)
            in_specs=[
                # Phase 1 pins the patch block index -> no patch re-DMA.
                pl.BlockSpec((k_dim, tile_m), lambda p, i: (0, i * (1 - p))),
                pl.BlockSpec((cout, k_dim), lambda p, i: (0, 0)),
                pl.BlockSpec((cout, 1), lambda p, i: (0, 0)),
                pl.BlockSpec((cout, 1), lambda p, i: (0, 0)),
            ],
            # Phase 0 pins the output block index (never written there), so no
            # garbage writeback; each block is flushed once with phase-1 data.
            out_specs=pl.BlockSpec((cout, tile_m), lambda p, i: (0, i * p)),
            scratch_shapes=[pltpu.VMEM((n_m, cout, tile_m), y_dtype),
                            pltpu.VMEM((cout, 1), jnp.float32),
                            pltpu.VMEM((cout, 1), jnp.float32)]),
        compiler_params=pltpu.CompilerParams(
            dimension_semantics=("arbitrary", "arbitrary"),
            vmem_limit_bytes=VMEM_LIMIT),
    )(p_mat, w_mat, gamma, beta)
    if m_pad != m:
        y = y[:, :m]
    return y


# -------------------------------------------------------------------------
# Parameters
# -------------------------------------------------------------------------
def init_raw_params(key, channels, feature_maps):
    nf = feature_maps
    k1, k2, k3, k4 = jax.random.split(key, 4)
    std = 0.02  # DCGAN-style init
    return {
        "w1": jax.random.normal(k1, (nf, channels, 4, 4), jnp.float32) * std,
        "w2": jax.random.normal(k2, (2 * nf, nf, 4, 4), jnp.float32) * std,
        "g2": jnp.ones((2 * nf,), jnp.float32),
        "b2": jnp.zeros((2 * nf,), jnp.float32),
        "w3": jax.random.normal(k3, (4 * nf, 2 * nf, 4, 4), jnp.float32) * std,
        "g3": jnp.ones((4 * nf,), jnp.float32),
        "b3": jnp.zeros((4 * nf,), jnp.float32),
        "w4": jax.random.normal(k4, (1, 4 * nf, 4, 4), jnp.float32) * std,
    }


def prepare_params(raw):
    """Precompute MXU-ready bf16 weight matrices and (Cout,1) BN params once."""
    def mat(w):
        return w.reshape(w.shape[0], -1).astype(jnp.bfloat16)
    return {
        "w1m": mat(raw["w1"]),
        "w2m": mat(raw["w2"]),
        "g2": raw["g2"].reshape(-1, 1),
        "b2": raw["b2"].reshape(-1, 1),
        "w3m": mat(raw["w3"]),
        "g3": raw["g3"].reshape(-1, 1),
        "b3": raw["b3"].reshape(-1, 1),
        # Layer 4 sees only padding in kernel row/col 0 (3x3 input, 1 output
        # pixel), so just the interior 3x3 of w4 is needed -> pure matmul.
        "w4s": raw["w4"][:, :, 1:, 1:].reshape(1, -1).astype(jnp.bfloat16),
    }


# -------------------------------------------------------------------------
# Forward pass
# -------------------------------------------------------------------------
def discriminator_mnist_forward(params, img):
    """img: (N, nc, 28, 28) float32 NCHW. Returns shape (N,)."""
    n = img.shape[0]
    # Single NCHW -> CNHW transpose for the whole forward; bf16 activations.
    x = img.astype(jnp.bfloat16).transpose(1, 0, 2, 3)            # (nc, N, 28, 28)

    # Layer 1: conv + LeakyReLU.
    p1, ho1, wo1 = im2col_cnhw(x)                                  # (nc*16, N*196)
    h1 = matmul_act(p1, params["w1m"], act="lrelu", out_dtype=jnp.bfloat16)
    h1 = h1.reshape(-1, n, ho1, wo1)                               # (nf, N, 14, 14)

    # Layer 2: conv + BN + LeakyReLU.
    p2, ho2, wo2 = im2col_cnhw(h1)                                 # (nf*16, N*49)
    h2 = conv_bn_act(p2, params["w2m"], params["g2"], params["b2"],
                     out_dtype=jnp.bfloat16)
    h2 = h2.reshape(-1, n, ho2, wo2)                               # (2nf, N, 7, 7)

    # Layer 3: conv + BN + LeakyReLU, M ordered (h, w, n) so layer 4 needs
    # no im2col and its input reshape is a free row-major metadata reshape.
    p3, _, _ = im2col_cnhw(h2, m_order="hwn")                      # (2nf*16, 9*N)
    h3 = conv_bn_act(p3, params["w3m"], params["g3"], params["b3"],
                     out_dtype=jnp.bfloat16)                       # (4nf, 9*N)
    h3 = h3.reshape(-1, n)                                         # (4nf*9, N)

    # Layer 4: plain matmul + sigmoid.
    y = matmul_act(h3, params["w4s"], act="sigmoid", out_dtype=jnp.float32)  # (1, N)
    return y.reshape(n)        # (N,)  ==  view(-1, 1).squeeze(1)


# -------------------------------------------------------------------------
# Pure-JAX f32 reference (for correctness check only)
# -------------------------------------------------------------------------
def reference_forward(raw, img):
    def conv(x, w):
        return jax.lax.conv_general_dilated(
            x, w, window_strides=(STRIDE, STRIDE),
            padding=((PAD, PAD), (PAD, PAD)),
            dimension_numbers=("NCHW", "OIHW", "NCHW"))

    def lrelu(x):
        return jnp.where(x >= 0, x, LRELU_SLOPE * x)

    def bn(x, g, b):
        mean = jnp.mean(x, axis=(0, 2, 3), keepdims=True)
        var = jnp.mean(jnp.square(x - mean), axis=(0, 2, 3), keepdims=True)
        return ((x - mean) * jax.lax.rsqrt(var + BN_EPS)
                * g.reshape(1, -1, 1, 1) + b.reshape(1, -1, 1, 1))

    h = lrelu(conv(img, raw["w1"]))
    h = lrelu(bn(conv(h, raw["w2"]), raw["g2"], raw["b2"]))
    h = lrelu(bn(conv(h, raw["w3"]), raw["g3"], raw["b3"]))
    h = jax.nn.sigmoid(conv(h, raw["w4"]))
    return h.reshape(-1)


if __name__ == "__main__":
    key = jax.random.PRNGKey(0)
    kp, kx = jax.random.split(key)

    channels = 1       # MNIST channels
    feature_maps = 8   # small nf
    batch = 2

    raw = init_raw_params(kp, channels, feature_maps)
    params = prepare_params(raw)
    img = jax.random.normal(kx, (batch, channels, 28, 28), jnp.float32)

    fwd = jax.jit(discriminator_mnist_forward)
    out = jax.block_until_ready(fwd(params, img))
    ref = jax.block_until_ready(reference_forward(raw, img))

    assert out.shape == (batch,), out.shape
    assert bool(jnp.all(jnp.isfinite(out)))
    assert bool(jnp.all((out > -1e-3) & (out < 1.0 + 1e-3)))
    assert float(jnp.max(jnp.abs(out - ref))) < 3e-2, (out, ref)
    print("KERNEL_OK")
</pallas_src>

<mosaic_0001>
module attributes {stable_mosaic.version = 11 : i64} {
  func.func @matmul_act_kernel(%arg0: i32, %arg1: memref<16x392xbf16, #tpu.memory_space<vmem>>, %arg2: memref<8x16xbf16, #tpu.memory_space<vmem>>, %arg3: memref<8x392xbf16, #tpu.memory_space<vmem>>) attributes {dimension_semantics = [#tpu.dimension_semantics<parallel>], iteration_bounds = array<i64: 1>, scalar_prefetch = 0 : i64, scratch_operands = 0 : i64, tpu.core_type = #tpu.core_type<tc>, window_params = [{transform_indices = @transform_0, window_bounds = array<i64: 16, 392>}, {pipeline_mode = #tpu.pipeline_mode<synchronous>, transform_indices = @transform_1, window_bounds = array<i64: 8, 16>}, {transform_indices = @transform_2, window_bounds = array<i64: 8, 392>}]} {
    %c0 = arith.constant 0 : index
    %c0_0 = arith.constant 0 : index
    %0 = vector.load %arg2[%c0, %c0_0] : memref<8x16xbf16, #tpu.memory_space<vmem>>, vector<8x16xbf16>
    %c0_1 = arith.constant 0 : index
    %c0_2 = arith.constant 0 : index
    %1 = vector.load %arg1[%c0_1, %c0_2] : memref<16x392xbf16, #tpu.memory_space<vmem>>, vector<16x392xbf16>
    %cst = arith.constant dense<0.000000e+00> : vector<8x392xf32>
    %2 = tpu.matmul %0, %1, %cst {dimension_numbers = #tpu.dot_dimension_numbers<[1], [0], [0], [1], [0, 0, 1, 1], [], []>} : vector<8x16xbf16>, vector<16x392xbf16>, vector<8x392xf32> -> vector<8x392xf32>
    %cst_3 = arith.constant 0.000000e+00 : f32
    %3 = vector.broadcast %cst_3 : f32 to vector<8x392xf32>
    %4 = arith.cmpf oge, %2, %3 : vector<8x392xf32>
    %cst_4 = arith.constant 2.000000e-01 : f32
    %5 = vector.broadcast %cst_4 : f32 to vector<8x392xf32>
    %6 = arith.mulf %5, %2 : vector<8x392xf32>
    %7 = arith.select %4, %2, %6 : vector<8x392xi1>, vector<8x392xf32>
    %8 = arith.truncf %7 : vector<8x392xf32> to vector<8x392xbf16>
    %c0_5 = arith.constant 0 : index
    %c0_6 = arith.constant 0 : index
    %9 = vector.load %arg3[%c0_5, %c0_6] : memref<8x392xbf16, #tpu.memory_space<vmem>>, vector<8x392xbf16>
    tpu.vector_store %arg3[%c0_5, %c0_6], %8 {strides = array<i32>} : memref<8x392xbf16, #tpu.memory_space<vmem>>, vector<8x392xbf16>,
    return
  }
  func.func @transform_0(%arg0: i32) -> (i32, i32) {
    %c0_i32 = arith.constant 0 : i32
    %c0_i32_0 = arith.constant 0 : i32
    return %c0_i32, %arg0 : i32, i32
  }
  func.func @transform_1(%arg0: i32) -> (i32, i32) {
    %c0_i32 = arith.constant 0 : i32
    %c0_i32_0 = arith.constant 0 : i32
    %c0_i32_1 = arith.constant 0 : i32
    return %c0_i32, %c0_i32_0 : i32, i32
  }
  func.func @transform_2(%arg0: i32) -> (i32, i32) {
    %c0_i32 = arith.constant 0 : i32
    %c0_i32_0 = arith.constant 0 : i32
    return %c0_i32, %arg0 : i32, i32
  }
}

module attributes {stable_mosaic.version = 11 : i64} {
  func.func @conv_bn_act_kernel(%arg0: i32, %arg1: i32, %arg2: memref<128x98xbf16, #tpu.memory_space<vmem>>, %arg3: memref<16x128xbf16, #tpu.memory_space<vmem>>, %arg4: memref<16x1xf32, #tpu.memory_space<vmem>>, %arg5: memref<16x1xf32, #tpu.memory_space<vmem>>, %arg6: memref<16x98xbf16, #tpu.memory_space<vmem>>, %arg7: memref<1x16x98xf32, #tpu.memory_space<vmem>>, %arg8: memref<16x1xf32, #tpu.memory_space<vmem>>, %arg9: memref<16x1xf32, #tpu.memory_space<vmem>>) attributes {dimension_semantics = [#tpu.dimension_semantics<arbitrary>, #tpu.dimension_semantics<arbitrary>], iteration_bounds = array<i64: 2, 1>, scalar_prefetch = 0 : i64, scratch_operands = 3 : i64, tpu.core_type = #tpu.core_type<tc>, window_params = [{transform_indices = @transform_0, window_bounds = array<i64: 128, 98>}, {pipeline_mode = #tpu.pipeline_mode<synchronous>, transform_indices = @transform_1, window_bounds = array<i64: 16, 128>}, {pipeline_mode = #tpu.pipeline_mode<synchronous>, transform_indices = @transform_2, window_bounds = array<i64: 16, 1>}, {pipeline_mode = #tpu.pipeline_mode<synchronous>, transform_indices = @transform_3, window_bounds = array<i64: 16, 1>}, {transform_indices = @transform_4, window_bounds = array<i64: 16, 98>}]} {
    %c0_i32 = arith.constant 0 : i32
    %0 = arith.cmpi eq, %arg0, %c0_i32 : i32
    %c0_i32_0 = arith.constant 0 : i32
    %1 = arith.cmpi eq, %arg1, %c0_i32_0 : i32
    %2 = arith.andi %0, %1 : i1
    %3 = arith.extui %2 : i1 to i32
    %c0_i32_1 = arith.constant 0 : i32
    %4 = arith.cmpi ne, %3, %c0_i32_1 : i32
    scf.if %4 {
      %cst = arith.constant 0.000000e+00 : f32
      %11 = vector.broadcast %cst : f32 to vector<16x1xf32>
      %c0 = arith.constant 0 : index
      %c0_5 = arith.constant 0 : index
      %12 = vector.load %arg8[%c0, %c0_5] : memref<16x1xf32, #tpu.memory_space<vmem>>, vector<16x1xf32>
      tpu.vector_store %arg8[%c0, %c0_5], %11 {strides = array<i32>} : memref<16x1xf32, #tpu.memory_space<vmem>>, vector<16x1xf32>,
      %cst_6 = arith.constant 0.000000e+00 : f32
      %13 = vector.broadcast %cst_6 : f32 to vector<16x1xf32>
      %c0_7 = arith.constant 0 : index
      %c0_8 = arith.constant 0 : index
      %14 = vector.load %arg9[%c0_7, %c0_8] : memref<16x1xf32, #tpu.memory_space<vmem>>, vector<16x1xf32>
      tpu.vector_store %arg9[%c0_7, %c0_8], %13 {strides = array<i32>} : memref<16x1xf32, #tpu.memory_space<vmem>>, vector<16x1xf32>,
    } else {
    }
    %c0_i32_2 = arith.constant 0 : i32
    %5 = arith.cmpi eq, %arg0, %c0_i32_2 : i32
    %6 = arith.extui %5 : i1 to i32
    %c0_i32_3 = arith.constant 0 : i32
    %7 = arith.cmpi ne, %6, %c0_i32_3 : i32
    scf.if %7 {
      %c0 = arith.constant 0 : index
      %c0_5 = arith.constant 0 : index
      %11 = vector.load %arg3[%c0, %c0_5] : memref<16x128xbf16, #tpu.memory_space<vmem>>, vector<16x128xbf16>
      %c0_6 = arith.constant 0 : index
      %c0_7 = arith.constant 0 : index
      %12 = vector.load %arg2[%c0_6, %c0_7] : memref<128x98xbf16, #tpu.memory_space<vmem>>, vector<128x98xbf16>
      %cst = arith.constant dense<0.000000e+00> : vector<16x98xf32>
      %13 = tpu.matmul %11, %12, %cst {dimension_numbers = #tpu.dot_dimension_numbers<[1], [0], [0], [1], [0, 0, 1, 1], [], []>} : vector<16x128xbf16>, vector<128x98xbf16>, vector<16x98xf32> -> vector<16x98xf32>
      %14 = arith.index_cast %arg1 : i32 to index
      %c0_8 = arith.constant 0 : index
      %c0_9 = arith.constant 0 : index
      %15 = vector.load %arg7[%14, %c0_8, %c0_9] : memref<1x16x98xf32, #tpu.memory_space<vmem>>, vector<1x16x98xf32>
      %16 = vector.shape_cast %15 : vector<1x16x98xf32> to vector<16x98xf32>
      %17 = vector.shape_cast %13 : vector<16x98xf32> to vector<1x16x98xf32>
      tpu.vector_store %arg7[%14, %c0_8, %c0_9], %17 {strides = array<i32>} : memref<1x16x98xf32, #tpu.memory_space<vmem>>, vector<1x16x98xf32>,
      %c0_10 = arith.constant 0 : index
      %c0_11 = arith.constant 0 : index
      %18 = vector.load %arg8[%c0_10, %c0_11] : memref<16x1xf32, #tpu.memory_space<vmem>>, vector<16x1xf32>
      %cst_12 = arith.constant dense<0.000000e+00> : vector<16xf32>
      %19 = vector.multi_reduction <add>, %13, %cst_12 [1] : vector<16x98xf32> to vector<16xf32>
      %20 = vector.shape_cast %19 : vector<16xf32> to vector<16x1xf32>
      %21 = arith.addf %18, %20 : vector<16x1xf32>
      %c0_13 = arith.constant 0 : index
      %c0_14 = arith.constant 0 : index
      %22 = vector.load %arg8[%c0_13, %c0_14] : memref<16x1xf32, #tpu.memory_space<vmem>>, vector<16x1xf32>
      tpu.vector_store %arg8[%c0_13, %c0_14], %21 {strides = array<i32>} : memref<16x1xf32, #tpu.memory_space<vmem>>, vector<16x1xf32>,
      %c0_15 = arith.constant 0 : index
      %c0_16 = arith.constant 0 : index
      %23 = vector.load %arg9[%c0_15, %c0_16] : memref<16x1xf32, #tpu.memory_space<vmem>>, vector<16x1xf32>
      %24 = arith.mulf %13, %13 : vector<16x98xf32>
      %cst_17 = arith.constant dense<0.000000e+00> : vector<16xf32>
      %25 = vector.multi_reduction <add>, %24, %cst_17 [1] : vector<16x98xf32> to vector<16xf32>
      %26 = vector.shape_cast %25 : vector<16xf32> to vector<16x1xf32>
      %27 = arith.addf %23, %26 : vector<16x1xf32>
      %c0_18 = arith.constant 0 : index
      %c0_19 = arith.constant 0 : index
      %28 = vector.load %arg9[%c0_18, %c0_19] : memref<16x1xf32, #tpu.memory_space<vmem>>, vector<16x1xf32>
      tpu.vector_store %arg9[%c0_18, %c0_19], %27 {strides = array<i32>} : memref<16x1xf32, #tpu.memory_space<vmem>>, vector<16x1xf32>,
    } else {
    }
    %c1_i32 = arith.constant 1 : i32
    %8 = arith.cmpi eq, %arg0, %c1_i32 : i32
    %9 = arith.extui %8 : i1 to i32
    %c0_i32_4 = arith.constant 0 : i32
    %10 = arith.cmpi ne, %9, %c0_i32_4 : i32
    scf.if %10 {
      %c0 = arith.constant 0 : index
      %c0_5 = arith.constant 0 : index
      %11 = vector.load %arg8[%c0, %c0_5] : memref<16x1xf32, #tpu.memory_space<vmem>>, vector<16x1xf32>
      %cst = arith.constant 0.0102040814 : f32
      %12 = vector.broadcast %cst : f32 to vector<16x1xf32>
      %13 = arith.mulf %11, %12 : vector<16x1xf32>
      %c0_6 = arith.constant 0 : index
      %c0_7 = arith.constant 0 : index
      %14 = vector.load %arg9[%c0_6, %c0_7] : memref<16x1xf32, #tpu.memory_space<vmem>>, vector<16x1xf32>
      %cst_8 = arith.constant 0.0102040814 : f32
      %15 = vector.broadcast %cst_8 : f32 to vector<16x1xf32>
      %16 = arith.mulf %14, %15 : vector<16x1xf32>
      %17 = arith.mulf %13, %13 : vector<16x1xf32>
      %18 = arith.subf %16, %17 : vector<16x1xf32>
      %cst_9 = arith.constant 0.000000e+00 : f32
      %19 = vector.broadcast %cst_9 : f32 to vector<16x1xf32>
      %20 = arith.maximumf %18, %19 : vector<16x1xf32>
      %21 = arith.index_cast %arg1 : i32 to index
      %c0_10 = arith.constant 0 : index
      %c0_11 = arith.constant 0 : index
      %22 = vector.load %arg7[%21, %c0_10, %c0_11] : memref<1x16x98xf32, #tpu.memory_space<vmem>>, vector<1x16x98xf32>
      %23 = vector.shape_cast %22 : vector<1x16x98xf32> to vector<16x98xf32>
      %24 = vector.broadcast %13 : vector<16x1xf32> to vector<16x98xf32>
      %25 = arith.subf %23, %24 : vector<16x98xf32>
      %cst_12 = arith.constant 9.99999974E-6 : f32
      %26 = vector.broadcast %cst_12 : f32 to vector<16x1xf32>
      %27 = arith.addf %20, %26 : vector<16x1xf32>
      %28 = math.rsqrt %27 : vector<16x1xf32>
      %29 = vector.broadcast %28 : vector<16x1xf32> to vector<16x98xf32>
      %30 = arith.mulf %25, %29 : vector<16x98xf32>
      %c0_13 = arith.constant 0 : index
      %c0_14 = arith.constant 0 : index
      %31 = vector.load %arg4[%c0_13, %c0_14] : memref<16x1xf32, #tpu.memory_space<vmem>>, vector<16x1xf32>
      %32 = vector.broadcast %31 : vector<16x1xf32> to vector<16x98xf32>
      %33 = arith.mulf %30, %32 : vector<16x98xf32>
      %c0_15 = arith.constant 0 : index
      %c0_16 = arith.constant 0 : index
      %34 = vector.load %arg5[%c0_15, %c0_16] : memref<16x1xf32, #tpu.memory_space<vmem>>, vector<16x1xf32>
      %35 = vector.broadcast %34 : vector<16x1xf32> to vector<16x98xf32>
      %36 = arith.addf %33, %35 : vector<16x98xf32>
      %cst_17 = arith.constant 0.000000e+00 : f32
      %37 = vector.broadcast %cst_17 : f32 to vector<16x98xf32>
      %38 = arith.cmpf oge, %36, %37 : vector<16x98xf32>
      %cst_18 = arith.constant 2.000000e-01 : f32
      %39 = vector.broadcast %cst_18 : f32 to vector<16x98xf32>
      %40 = arith.mulf %39, %36 : vector<16x98xf32>
      %41 = arith.select %38, %36, %40 : vector<16x98xi1>, vector<16x98xf32>
      %42 = arith.truncf %41 : vector<16x98xf32> to vector<16x98xbf16>
      %c0_19 = arith.constant 0 : index
      %c0_20 = arith.constant 0 : index
      %43 = vector.load %arg6[%c0_19, %c0_20] : memref<16x98xbf16, #tpu.memory_space<vmem>>, vector<16x98xbf16>
      tpu.vector_store %arg6[%c0_19, %c0_20], %42 {strides = array<i32>} : memref<16x98xbf16, #tpu.memory_space<vmem>>, vector<16x98xbf16>,
    } else {
    }
    return
  }
  func.func @transform_0(%arg0: i32, %arg1: i32) -> (i32, i32) {
    %c1_i32 = arith.constant 1 : i32
    %0 = arith.subi %c1_i32, %arg0 : i32
    %1 = arith.muli %arg1, %0 : i32
    %c0_i32 = arith.constant 0 : i32
    %c0_i32_0 = arith.constant 0 : i32
    return %c0_i32, %1 : i32, i32
  }
  func.func @transform_1(%arg0: i32, %arg1: i32) -> (i32, i32) {
    %c0_i32 = arith.constant 0 : i32
    %c0_i32_0 = arith.constant 0 : i32
    %c0_i32_1 = arith.constant 0 : i32
    return %c0_i32, %c0_i32_0 : i32, i32
  }
  func.func @transform_2(%arg0: i32, %arg1: i32) -> (i32, i32) {
    %c0_i32 = arith.constant 0 : i32
    %c0_i32_0 = arith.constant 0 : i32
    %c0_i32_1 = arith.constant 0 : i32
    return %c0_i32, %c0_i32_0 : i32, i32
  }
  func.func @transform_3(%arg0: i32, %arg1: i32) -> (i32, i32) {
    %c0_i32 = arith.constant 0 : i32
    %c0_i32_0 = arith.constant 0 : i32
    %c0_i32_1 = arith.constant 0 : i32
    return %c0_i32, %c0_i32_0 : i32, i32
  }
  func.func @transform_4(%arg0: i32, %arg1: i32) -> (i32, i32) {
    %0 = arith.muli %arg1, %arg0 : i32
    %c0_i32 = arith.constant 0 : i32
    %c0_i32_0 = arith.constant 0 : i32
    return %c0_i32, %0 : i32, i32
  }
}

module attributes {stable_mosaic.version = 11 : i64} {
  func.func @conv_bn_act_kernel(%arg0: i32, %arg1: i32, %arg2: memref<256x18xbf16, #tpu.memory_space<vmem>>, %arg3: memref<32x256xbf16, #tpu.memory_space<vmem>>, %arg4: memref<32x1xf32, #tpu.memory_space<vmem>>, %arg5: memref<32x1xf32, #tpu.memory_space<vmem>>, %arg6: memref<32x18xbf16, #tpu.memory_space<vmem>>, %arg7: memref<1x32x18xf32, #tpu.memory_space<vmem>>, %arg8: memref<32x1xf32, #tpu.memory_space<vmem>>, %arg9: memref<32x1xf32, #tpu.memory_space<vmem>>) attributes {dimension_semantics = [#tpu.dimension_semantics<arbitrary>, #tpu.dimension_semantics<arbitrary>], iteration_bounds = array<i64: 2, 1>, scalar_prefetch = 0 : i64, scratch_operands = 3 : i64, tpu.core_type = #tpu.core_type<tc>, window_params = [{transform_indices = @transform_0, window_bounds = array<i64: 256, 18>}, {pipeline_mode = #tpu.pipeline_mode<synchronous>, transform_indices = @transform_1, window_bounds = array<i64: 32, 256>}, {pipeline_mode = #tpu.pipeline_mode<synchronous>, transform_indices = @transform_2, window_bounds = array<i64: 32, 1>}, {pipeline_mode = #tpu.pipeline_mode<synchronous>, transform_indices = @transform_3, window_bounds = array<i64: 32, 1>}, {transform_indices = @transform_4, window_bounds = array<i64: 32, 18>}]} {
    %c0_i32 = arith.constant 0 : i32
    %0 = arith.cmpi eq, %arg0, %c0_i32 : i32
    %c0_i32_0 = arith.constant 0 : i32
    %1 = arith.cmpi eq, %arg1, %c0_i32_0 : i32
    %2 = arith.andi %0, %1 : i1
    %3 = arith.extui %2 : i1 to i32
    %c0_i32_1 = arith.constant 0 : i32
    %4 = arith.cmpi ne, %3, %c0_i32_1 : i32
    scf.if %4 {
      %cst = arith.constant 0.000000e+00 : f32
      %11 = vector.broadcast %cst : f32 to vector<32x1xf32>
      %c0 = arith.constant 0 : index
      %c0_5 = arith.constant 0 : index
      %12 = vector.load %arg8[%c0, %c0_5] : memref<32x1xf32, #tpu.memory_space<vmem>>, vector<32x1xf32>
      tpu.vector_store %arg8[%c0, %c0_5], %11 {strides = array<i32>} : memref<32x1xf32, #tpu.memory_space<vmem>>, vector<32x1xf32>,
      %cst_6 = arith.constant 0.000000e+00 : f32
      %13 = vector.broadcast %cst_6 : f32 to vector<32x1xf32>
      %c0_7 = arith.constant 0 : index
      %c0_8 = arith.constant 0 : index
      %14 = vector.load %arg9[%c0_7, %c0_8] : memref<32x1xf32, #tpu.memory_space<vmem>>, vector<32x1xf32>
      tpu.vector_store %arg9[%c0_7, %c0_8], %13 {strides = array<i32>} : memref<32x1xf32, #tpu.memory_space<vmem>>, vector<32x1xf32>,
    } else {
    }
    %c0_i32_2 = arith.constant 0 : i32
    %5 = arith.cmpi eq, %arg0, %c0_i32_2 : i32
    %6 = arith.extui %5 : i1 to i32
    %c0_i32_3 = arith.constant 0 : i32
    %7 = arith.cmpi ne, %6, %c0_i32_3 : i32
    scf.if %7 {
      %c0 = arith.constant 0 : index
      %c0_5 = arith.constant 0 : index
      %11 = vector.load %arg3[%c0, %c0_5] : memref<32x256xbf16, #tpu.memory_space<vmem>>, vector<32x256xbf16>
      %c0_6 = arith.constant 0 : index
      %c0_7 = arith.constant 0 : index
      %12 = vector.load %arg2[%c0_6, %c0_7] : memref<256x18xbf16, #tpu.memory_space<vmem>>, vector<256x18xbf16>
      %cst = arith.constant dense<0.000000e+00> : vector<32x18xf32>
      %13 = tpu.matmul %11, %12, %cst {dimension_numbers = #tpu.dot_dimension_numbers<[1], [0], [0], [1], [0, 0, 1, 1], [], []>} : vector<32x256xbf16>, vector<256x18xbf16>, vector<32x18xf32> -> vector<32x18xf32>
      %14 = arith.index_cast %arg1 : i32 to index
      %c0_8 = arith.constant 0 : index
      %c0_9 = arith.constant 0 : index
      %15 = vector.load %arg7[%14, %c0_8, %c0_9] : memref<1x32x18xf32, #tpu.memory_space<vmem>>, vector<1x32x18xf32>
      %16 = vector.shape_cast %15 : vector<1x32x18xf32> to vector<32x18xf32>
      %17 = vector.shape_cast %13 : vector<32x18xf32> to vector<1x32x18xf32>
      tpu.vector_store %arg7[%14, %c0_8, %c0_9], %17 {strides = array<i32>} : memref<1x32x18xf32, #tpu.memory_space<vmem>>, vector<1x32x18xf32>,
      %c0_10 = arith.constant 0 : index
      %c0_11 = arith.constant 0 : index
      %18 = vector.load %arg8[%c0_10, %c0_11] : memref<32x1xf32, #tpu.memory_space<vmem>>, vector<32x1xf32>
      %cst_12 = arith.constant dense<0.000000e+00> : vector<32xf32>
      %19 = vector.multi_reduction <add>, %13, %cst_12 [1] : vector<32x18xf32> to vector<32xf32>
      %20 = vector.shape_cast %19 : vector<32xf32> to vector<32x1xf32>
      %21 = arith.addf %18, %20 : vector<32x1xf32>
      %c0_13 = arith.constant 0 : index
      %c0_14 = arith.constant 0 : index
      %22 = vector.load %arg8[%c0_13, %c0_14] : memref<32x1xf32, #tpu.memory_space<vmem>>, vector<32x1xf32>
      tpu.vector_store %arg8[%c0_13, %c0_14], %21 {strides = array<i32>} : memref<32x1xf32, #tpu.memory_space<vmem>>, vector<32x1xf32>,
      %c0_15 = arith.constant 0 : index
      %c0_16 = arith.constant 0 : index
      %23 = vector.load %arg9[%c0_15, %c0_16] : memref<32x1xf32, #tpu.memory_space<vmem>>, vector<32x1xf32>
      %24 = arith.mulf %13, %13 : vector<32x18xf32>
      %cst_17 = arith.constant dense<0.000000e+00> : vector<32xf32>
      %25 = vector.multi_reduction <add>, %24, %cst_17 [1] : vector<32x18xf32> to vector<32xf32>
      %26 = vector.shape_cast %25 : vector<32xf32> to vector<32x1xf32>
      %27 = arith.addf %23, %26 : vector<32x1xf32>
      %c0_18 = arith.constant 0 : index
      %c0_19 = arith.constant 0 : index
      %28 = vector.load %arg9[%c0_18, %c0_19] : memref<32x1xf32, #tpu.memory_space<vmem>>, vector<32x1xf32>
      tpu.vector_store %arg9[%c0_18, %c0_19], %27 {strides = array<i32>} : memref<32x1xf32, #tpu.memory_space<vmem>>, vector<32x1xf32>,
    } else {
    }
    %c1_i32 = arith.constant 1 : i32
    %8 = arith.cmpi eq, %arg0, %c1_i32 : i32
    %9 = arith.extui %8 : i1 to i32
    %c0_i32_4 = arith.constant 0 : i32
    %10 = arith.cmpi ne, %9, %c0_i32_4 : i32
    scf.if %10 {
      %c0 = arith.constant 0 : index
      %c0_5 = arith.constant 0 : index
      %11 = vector.load %arg8[%c0, %c0_5] : memref<32x1xf32, #tpu.memory_space<vmem>>, vector<32x1xf32>
      %cst = arith.constant 0.055555556 : f32
      %12 = vector.broadcast %cst : f32 to vector<32x1xf32>
      %13 = arith.mulf %11, %12 : vector<32x1xf32>
      %c0_6 = arith.constant 0 : index
      %c0_7 = arith.constant 0 : index
      %14 = vector.load %arg9[%c0_6, %c0_7] : memref<32x1xf32, #tpu.memory_space<vmem>>, vector<32x1xf32>
      %cst_8 = arith.constant 0.055555556 : f32
      %15 = vector.broadcast %cst_8 : f32 to vector<32x1xf32>
      %16 = arith.mulf %14, %15 : vector<32x1xf32>
      %17 = arith.mulf %13, %13 : vector<32x1xf32>
      %18 = arith.subf %16, %17 : vector<32x1xf32>
      %cst_9 = arith.constant 0.000000e+00 : f32
      %19 = vector.broadcast %cst_9 : f32 to vector<32x1xf32>
      %20 = arith.maximumf %18, %19 : vector<32x1xf32>
      %21 = arith.index_cast %arg1 : i32 to index
      %c0_10 = arith.constant 0 : index
      %c0_11 = arith.constant 0 : index
      %22 = vector.load %arg7[%21, %c0_10, %c0_11] : memref<1x32x18xf32, #tpu.memory_space<vmem>>, vector<1x32x18xf32>
      %23 = vector.shape_cast %22 : vector<1x32x18xf32> to vector<32x18xf32>
      %24 = vector.broadcast %13 : vector<32x1xf32> to vector<32x18xf32>
      %25 = arith.subf %23, %24 : vector<32x18xf32>
      %cst_12 = arith.constant 9.99999974E-6 : f32
      %26 = vector.broadcast %cst_12 : f32 to vector<32x1xf32>
      %27 = arith.addf %20, %26 : vector<32x1xf32>
      %28 = math.rsqrt %27 : vector<32x1xf32>
      %29 = vector.broadcast %28 : vector<32x1xf32> to vector<32x18xf32>
      %30 = arith.mulf %25, %29 : vector<32x18xf32>
      %c0_13 = arith.constant 0 : index
      %c0_14 = arith.constant 0 : index
      %31 = vector.load %arg4[%c0_13, %c0_14] : memref<32x1xf32, #tpu.memory_space<vmem>>, vector<32x1xf32>
      %32 = vector.broadcast %31 : vector<32x1xf32> to vector<32x18xf32>
      %33 = arith.mulf %30, %32 : vector<32x18xf32>
      %c0_15 = arith.constant 0 : index
      %c0_16 = arith.constant 0 : index
      %34 = vector.load %arg5[%c0_15, %c0_16] : memref<32x1xf32, #tpu.memory_space<vmem>>, vector<32x1xf32>
      %35 = vector.broadcast %34 : vector<32x1xf32> to vector<32x18xf32>
      %36 = arith.addf %33, %35 : vector<32x18xf32>
      %cst_17 = arith.constant 0.000000e+00 : f32
      %37 = vector.broadcast %cst_17 : f32 to vector<32x18xf32>
      %38 = arith.cmpf oge, %36, %37 : vector<32x18xf32>
      %cst_18 = arith.constant 2.000000e-01 : f32
      %39 = vector.broadcast %cst_18 : f32 to vector<32x18xf32>
      %40 = arith.mulf %39, %36 : vector<32x18xf32>
      %41 = arith.select %38, %36, %40 : vector<32x18xi1>, vector<32x18xf32>
      %42 = arith.truncf %41 : vector<32x18xf32> to vector<32x18xbf16>
      %c0_19 = arith.constant 0 : index
      %c0_20 = arith.constant 0 : index
      %43 = vector.load %arg6[%c0_19, %c0_20] : memref<32x18xbf16, #tpu.memory_space<vmem>>, vector<32x18xbf16>
      tpu.vector_store %arg6[%c0_19, %c0_20], %42 {strides = array<i32>} : memref<32x18xbf16, #tpu.memory_space<vmem>>, vector<32x18xbf16>,
    } else {
    }
    return
  }
  func.func @transform_0(%arg0: i32, %arg1: i32) -> (i32, i32) {
    %c1_i32 = arith.constant 1 : i32
    %0 = arith.subi %c1_i32, %arg0 : i32
    %1 = arith.muli %arg1, %0 : i32
    %c0_i32 = arith.constant 0 : i32
    %c0_i32_0 = arith.constant 0 : i32
    return %c0_i32, %1 : i32, i32
  }
  func.func @transform_1(%arg0: i32, %arg1: i32) -> (i32, i32) {
    %c0_i32 = arith.constant 0 : i32
    %c0_i32_0 = arith.constant 0 : i32
    %c0_i32_1 = arith.constant 0 : i32
    return %c0_i32, %c0_i32_0 : i32, i32
  }
  func.func @transform_2(%arg0: i32, %arg1: i32) -> (i32, i32) {
    %c0_i32 = arith.constant 0 : i32
    %c0_i32_0 = arith.constant 0 : i32
    %c0_i32_1 = arith.constant 0 : i32
    return %c0_i32, %c0_i32_0 : i32, i32
  }
  func.func @transform_3(%arg0: i32, %arg1: i32) -> (i32, i32) {
    %c0_i32 = arith.constant 0 : i32
    %c0_i32_0 = arith.constant 0 : i32
    %c0_i32_1 = arith.constant 0 : i32
    return %c0_i32, %c0_i32_0 : i32, i32
  }
  func.func @transform_4(%arg0: i32, %arg1: i32) -> (i32, i32) {
    %0 = arith.muli %arg1, %arg0 : i32
    %c0_i32 = arith.constant 0 : i32
    %c0_i32_0 = arith.constant 0 : i32
    return %c0_i32, %0 : i32, i32
  }
}

module attributes {stable_mosaic.version = 11 : i64} {
  func.func @matmul_act_kernel(%arg0: i32, %arg1: memref<288x2xbf16, #tpu.memory_space<vmem>>, %arg2: memref<1x288xbf16, #tpu.memory_space<vmem>>, %arg3: memref<1x2xf32, #tpu.memory_space<vmem>>) attributes {dimension_semantics = [#tpu.dimension_semantics<parallel>], iteration_bounds = array<i64: 1>, scalar_prefetch = 0 : i64, scratch_operands = 0 : i64, tpu.core_type = #tpu.core_type<tc>, window_params = [{transform_indices = @transform_0, window_bounds = array<i64: 288, 2>}, {pipeline_mode = #tpu.pipeline_mode<synchronous>, transform_indices = @transform_1, window_bounds = array<i64: 1, 288>}, {transform_indices = @transform_2, window_bounds = array<i64: 1, 2>}]} {
    %c0 = arith.constant 0 : index
    %c0_0 = arith.constant 0 : index
    %0 = vector.load %arg2[%c0, %c0_0] : memref<1x288xbf16, #tpu.memory_space<vmem>>, vector<1x288xbf16>
    %c0_1 = arith.constant 0 : index
    %c0_2 = arith.constant 0 : index
    %1 = vector.load %arg1[%c0_1, %c0_2] : memref<288x2xbf16, #tpu.memory_space<vmem>>, vector<288x2xbf16>
    %cst = arith.constant dense<0.000000e+00> : vector<1x2xf32>
    %2 = tpu.matmul %0, %1, %cst {dimension_numbers = #tpu.dot_dimension_numbers<[1], [0], [0], [1], [0, 0, 1, 1], [], []>} : vector<1x288xbf16>, vector<288x2xbf16>, vector<1x2xf32> -> vector<1x2xf32>
    %cst_3 = arith.constant 0.000000e+00 : f32
    %3 = vector.broadcast %cst_3 : f32 to vector<1x2xf32>
    %4 = arith.subf %3, %2 : vector<1x2xf32>
    %5 = math.exp %4 : vector<1x2xf32>
    %cst_4 = arith.constant 1.000000e+00 : f32
    %6 = vector.broadcast %cst_4 : f32 to vector<1x2xf32>
    %7 = arith.addf %6, %5 : vector<1x2xf32>
    %8 = tpu.reciprocal %7 {approx = true} : vector<1x2xf32> -> vector<1x2xf32>
    %c0_5 = arith.constant 0 : index
    %c0_6 = arith.constant 0 : index
    %9 = vector.load %arg3[%c0_5, %c0_6] : memref<1x2xf32, #tpu.memory_space<vmem>>, vector<1x2xf32>
    tpu.vector_store %arg3[%c0_5, %c0_6], %8 {strides = array<i32>} : memref<1x2xf32, #tpu.memory_space<vmem>>, vector<1x2xf32>,
    return
  }
  func.func @transform_0(%arg0: i32) -> (i32, i32) {
    %c0_i32 = arith.constant 0 : i32
    %c0_i32_0 = arith.constant 0 : i32
    return %c0_i32, %arg0 : i32, i32
  }
  func.func @transform_1(%arg0: i32) -> (i32, i32) {
    %c0_i32 = arith.constant 0 : i32
    %c0_i32_0 = arith.constant 0 : i32
    %c0_i32_1 = arith.constant 0 : i32
    return %c0_i32, %c0_i32_0 : i32, i32
  }
  func.func @transform_2(%arg0: i32) -> (i32, i32) {
    %c0_i32 = arith.constant 0 : i32
    %c0_i32_0 = arith.constant 0 : i32
    return %c0_i32, %arg0 : i32, i32
  }
}

</mosaic_0001>

<llo_original>
// kernel: discriminator_mnist_forward.4
$region0: #{discriminator_mnist_forward.4}
  #allocation0 [shape = 'u32[]', space=smem, size = 0x4, offset = 0x4, fixed_abs, tag = 'smem constant byte address 0x4 - core index']
  #allocation1 [shape = 'u32[144,128]{1,0:T(1,128)}', space=vmem, size = 0x12000, scoped, tag = 'internal scratch']
  %s0 = inlined_call_operand.vmem [shape: bf16[16,392], index: 0, kind: input, shape index: {}]
  %s1 = inlined_call_operand.vmem [shape: bf16[8,16], index: 1, kind: input, shape index: {}]
  %s2 = inlined_call_operand.vmem [shape: bf16[8,392], index: 2, kind: output, shape index: {}]
  %s3 = sld [smem:[#allocation0]]
  $region18: #{discriminator_mnist_forward.4} parent=0
    _
  %s5 = ssub.s32 1, %s3
  %s6 = scalar_select 0, %s5, %s3
  // Predicated region
  $region2: #{discriminator_mnist_forward.4} parent=0 // pred_check
    _
  $region3: #{discriminator_mnist_forward.4} parent=0 // pred_check_branch
    %8 = sbr.rel (0) target = $region5
  $region4: #{discriminator_mnist_forward.4} parent=0 // pred_region
    _
  $region5: #{discriminator_mnist_forward.4} parent=0 // pred_fallthru
    _
  // Predicated region
  $region6: #{discriminator_mnist_forward.4} parent=0 // pred_check
    _
  $region7: #{discriminator_mnist_forward.4} parent=0 // pred_check_branch
    %10 = sbr.rel (0) target = $region9
  $region8: #{discriminator_mnist_forward.4} parent=0 // pred_region
    _
  $region9: #{discriminator_mnist_forward.4} parent=0 // pred_fallthru
    _
  %v12 = vld [vmem:[%s1] sm:$0xf]
  %v13 = vld [vmem:[%s0] sm:$0xff]
  %v14 = vld [vmem:[%s0 + $0x8] sm:$0xff]
  %v15 = vld [vmem:[%s0 + $0x10] sm:$0xff]
  %v16 = vld [vmem:[%s0 + $0x18] sm:$0xff]
  %v21 = vunpack.c.l.b16 %v13
  %v22 = vunpack.c.h.b16 %v13
  %v23 = vunpack.c.l.b16 %v14
  %v24 = vunpack.c.h.b16 %v14
  %v25 = vunpack.c.l.b16 %v15
  %v26 = vunpack.c.h.b16 %v15
  %v27 = vunpack.c.l.b16 %v16
  %v28 = vunpack.c.h.b16 %v16
  %v29 = vpack.c.b16 %v25, %v21
  %v30 = vpack.c.b16 %v26, %v22
  %v31 = vpack.c.b16 %v27, %v23
  %v32 = vpack.c.b16 %v28, %v24
  %vm37 = vcmask 130048
  %v39 = vsel %vm37, %v12, 0
  %41 = vmatprep.subr.bf16.mxu0 %v30
  %42 = vmatpush1.bf16.msra.mxu0 %v29
  %43 = vmatprep.subr.bf16.mxu0 0
  %44 = vmatpush1.bf16.msra.mxu0 0
  %45 = vmatprep.subr.bf16.mxu0 0
  %46 = vmatpush1.bf16.msra.mxu0 0
  %47 = vmatprep.subr.bf16.mxu0 0
  %48 = vmatpush1.bf16.msra.mxu0 0
  %49 = vmatprep.subr.bf16.mxu0 0
  %50 = vmatpush1.bf16.msra.mxu0 0
  %51 = vmatprep.subr.bf16.mxu0 0
  %52 = vmatpush1.bf16.msra.mxu0 0
  %53 = vmatprep.subr.bf16.mxu0 0
  %54 = vmatpush1.bf16.msra.mxu0 0
  %55 = vmatprep.subr.bf16.mxu0 0
  %56 = vmatpush1.bf16.msra.mxu0 0
  %57 = vmatprep.subr.bf16.mxu0 0
  %58 = vmatpush1.bf16.msra.mxu0 0
  %59 = vmatprep.subr.bf16.mxu0 0
  %60 = vmatpush1.bf16.msra.mxu0 0
  %61 = vmatprep.subr.bf16.mxu0 0
  %62 = vmatpush1.bf16.msra.mxu0 0
  %63 = vmatprep.subr.bf16.mxu0 0
  %64 = vmatpush1.bf16.msra.mxu0 0
  %65 = vmatprep.subr.bf16.mxu0 0
  %66 = vmatpush1.bf16.msra.mxu0 0
  %67 = vmatprep.subr.bf16.mxu0 0
  %68 = vmatpush1.bf16.msra.mxu0 0
  %69 = vmatprep.subr.bf16.mxu0 0
  %70 = vmatpush1.bf16.msra.mxu0 0
  %71 = vmatprep.subr.bf16.mxu0 0
  %72 = vmatpush1.bf16.msra.mxu0 0
  %73 = vmatprep.mubr.bf16.mxu0 0
  %74 = vmatmul.mubr.bf16.gmra.mrb[0].mxu0 %v39
  %v75 = vpop.f32.mrb[0].mxu0
  %v76 = vadd.f32 0.0, %v75
  %v77 = vpop.f32.mrb[0].mxu0
  %v78 = vadd.f32 0.0, %v77
  %v79 = vpop.f32.mrb[0].mxu0
  %v80 = vpop.f32.mrb[0].mxu0
  %81 = vdwg.mxu0
  %82 = vmatprep.subr.bf16.mxu0 %v32
  %83 = vmatpush1.bf16.msra.mxu0 %v31
  %84 = vmatprep.subr.bf16.mxu0 0
  %85 = vmatpush1.bf16.msra.mxu0 0
  %86 = vmatprep.subr.bf16.mxu0 0
  %87 = vmatpush1.bf16.msra.mxu0 0
  %88 = vmatprep.subr.bf16.mxu0 0
  %89 = vmatpush1.bf16.msra.mxu0 0
  %90 = vmatprep.subr.bf16.mxu0 0
  %91 = vmatpush1.bf16.msra.mxu0 0
  %92 = vmatprep.subr.bf16.mxu0 0
  %93 = vmatpush1.bf16.msra.mxu0 0
  %94 = vmatprep.subr.bf16.mxu0 0
  %95 = vmatpush1.bf16.msra.mxu0 0
  %96 = vmatprep.subr.bf16.mxu0 0
  %97 = vmatpush1.bf16.msra.mxu0 0
  %98 = vmatprep.subr.bf16.mxu0 0
  %99 = vmatpush1.bf16.msra.mxu0 0
  %100 = vmatprep.subr.bf16.mxu0 0
  %101 = vmatpush1.bf16.msra.mxu0 0
  %102 = vmatprep.subr.bf16.mxu0 0
  %103 = vmatpush1.bf16.msra.mxu0 0
  %104 = vmatprep.subr.bf16.mxu0 0
  %105 = vmatpush1.bf16.msra.mxu0 0
  %106 = vmatprep.subr.bf16.mxu0 0
  %107 = vmatpush1.bf16.msra.mxu0 0
  %108 = vmatprep.subr.bf16.mxu0 0
  %109 = vmatpush1.bf16.msra.mxu0 0
  %110 = vmatprep.subr.bf16.mxu0 0
  %111 = vmatpush1.bf16.msra.mxu0 0
  %112 = vmatprep.subr.bf16.mxu0 0
  %113 = vmatpush1.bf16.msra.mxu0 0
  %114 = vmatprep.mubr.bf16.mxu0 0
  %115 = vmatmul.mubr.bf16.gmra.mrb[0].mxu0 %v39
  %v116 = vpop.f32.mrb[0].mxu0
  %v117 = vadd.f32 0.0, %v116
  %v118 = vpop.f32.mrb[0].mxu0
  %v119 = vadd.f32 0.0, %v118
  %v120 = vpop.f32.mrb[0].mxu0
  %v121 = vpop.f32.mrb[0].mxu0
  %122 = vdwg.mxu0
  %vm123 = vcmp.ge.f32.partialorder %v76, 0.0
  %vm124 = vcmp.ge.f32.partialorder %v78, 0.0
  %vm125 = vcmp.ge.f32.partialorder %v117, 0.0
  %vm126 = vcmp.ge.f32.partialorder %v119, 0.0
  %v127 = vmul.f32 %v76, 0.2
  %v128 = vmul.f32 %v78, 0.2
  %v129 = vmul.f32 %v117, 0.2
  %v130 = vmul.f32 %v119, 0.2
  %v131 = vsel %vm123, %v76, %v127
  %v132 = vsel %vm124, %v78, %v128
  %v133 = vsel %vm125, %v117, %v129
  %v134 = vsel %vm126, %v119, %v130
  %v135 = vpack.c.bf16 %v131, %v131
  %v136 = vpack.c.bf16 %v132, %v132
  %v137 = vpack.c.bf16 %v133, %v133
  %v138 = vpack.c.bf16 %v134, %v134
  %v143 = vunpack.c.l.b16 %v135
  %v144 = vunpack.c.l.b16 %v136
  %v145 = vunpack.c.l.b16 %v137
  %v146 = vunpack.c.l.b16 %v138
  %v147 = vpack.c.b16 %v144, %v143
  %v148 = vpack.c.b16 %v146, %v145
  %151 = vst [vmem:[%s2] sm:$0xff] %v147
  %vm152 = vcmask 1043456
  %vm153 = vcmask 64516
  %vm154 = vmor %vm153, %vm152
  %155 = vst.msk [vmem:[%s2 + $0x8] sm:$0xff] %vm154, %v148
  // Predicated region
  $region10: #{discriminator_mnist_forward.4} parent=0 // pred_check
    _
  $region11: #{discriminator_mnist_forward.4} parent=0 // pred_check_branch
    %157 = sbr.rel (0) target = $region13
  $region12: #{discriminator_mnist_forward.4} parent=0 // pred_region
    _
  $region13: #{discriminator_mnist_forward.4} parent=0 // pred_fallthru
    _
  // Predicated region
  $region14: #{discriminator_mnist_forward.4} parent=0 // pred_check
    _
  $region15: #{discriminator_mnist_forward.4} parent=0 // pred_check_branch
    %159 = sbr.rel (0) target = $region17
  $region16: #{discriminator_mnist_forward.4} parent=0 // pred_region
    _
  $region17: #{discriminator_mnist_forward.4} parent=0 // pred_fallthru
    _

// kernel: discriminator_mnist_forward.5
$region0: #{discriminator_mnist_forward.5}
  #allocation0 [shape = 'u32[]', space=smem, size = 0x4, offset = 0x4, fixed_abs, tag = 'smem constant byte address 0x4 - core index']
  #allocation1 [shape = 'u32[144,128]{1,0:T(1,128)}', space=vmem, size = 0x12000, scoped, tag = 'internal scratch']
  #allocation2 [shape = 'f32[1,16,98]{2,1,0:T(8,128)}', space=vmem, size = 0x2000, scoped, tag = 'scratch operand']
  #allocation3 [shape = 'f32[16,1]{1,0:T(8,128)}', space=vmem, size = 0x2000, scoped, tag = 'scratch operand']
  #allocation4 [shape = 'f32[16,1]{1,0:T(8,128)}', space=vmem, size = 0x2000, scoped, tag = 'scratch operand']
  %s0 = inlined_call_operand.vmem [shape: bf16[128,98], index: 0, kind: input, shape index: {}]
  %s1 = inlined_call_operand.vmem [shape: bf16[16,128], index: 1, kind: input, shape index: {}]
  %s2 = inlined_call_operand.vmem [shape: f32[16,1], index: 2, kind: input, shape index: {}]
  %s3 = inlined_call_operand.vmem [shape: f32[16,1], index: 3, kind: input, shape index: {}]
  %s4 = inlined_call_operand.vmem [shape: bf16[16,98], index: 4, kind: output, shape index: {}]
  %s5 = sld [smem:[#allocation0]]
  $region61: #{discriminator_mnist_forward.5} parent=0
    _
  %s7 = ssub.s32 1, %s5
  %s8 = scalar_select 0, %s7, %s5
  loop: start=0, step=1, limit=4
  $region2: #{discriminator_mnist_forward.5} parent=0 // loop_pre_header
    _
  $region3: #{discriminator_mnist_forward.5} parent=0 // loop_header
    %s10 = sphi 0, %s14
    %p11 = scmp.ge.s32.totalorder %s10, 4
    %s17 = sphi 0, %s29
    %s18 = sphi 0, %s25
    %s19 = sphi 0, %s17
    %s20 = sphi 0, %s18
    %s21 = sphi 0, %s19
    %s22 = sphi 0, %s20
    %s36 = sphi 0, %s38
    %s39 = sphi 0, %s36
    %s40 = sphi 0, %s39
    %s56 = sphi 0, %s40
    %s60 = sphi 0, %s60
    %s62 = sphi 0, %s60
    %s63 = sphi 0, %s62
    %s77 = sphi 0, %s63
    %s81 = sphi 0, %s81
    %s83 = sphi 0, %s81
    %s84 = sphi 0, %s83
    %s98 = sphi 0, %s84
    %s102 = sphi 0, %s102
    %s104 = sphi 0, %s102
    %s105 = sphi 0, %s104
    %s119 = sphi 0, %s105
    %s127 = sphi 0, %s129
    %s130 = sphi 0, %s127
    %s131 = sphi 0, %s130
    %s147 = sphi 0, %s131
  $region4: #{discriminator_mnist_forward.5} parent=0 // loop_header_branch
    %13 = sbr.rel (%p11) target = $region8
  $region5: #{discriminator_mnist_forward.5} parent=0 // loop_body
    %s15 = ssub.s32 %s10, 1
    %s16 = ssub.s32 %s10, 2
    %s23 = sadd.s32 1, %s18
    %p24 = scmp.ge.s32.totalorder %s23, 1
    %s25 = scalar_select %p24, 0, %s23
    %s26 = sadd.s32 1, %s17
    %s27 = scalar_select %p24, %s26, %s17
    %p28 = scmp.ge.s32.totalorder %s27, 2
    %s29 = scalar_select %p28, 0, %s27
    %s30 = ssub.s32 1, %s17
    %s31 = smul.u32 %s18, %s30
    %s32 = ssub.s32 1, %s29
    %s33 = smul.u32 %s25, %s32
    %s34 = ssub.s32 %s31, %s33
    %p35 = scmp.eq.s32.totalorder %s34, 0
    %s37 = sadd.s32 %s36, 1
    %s38 = scalar_select %p35, %s36, %s37
    %p41 = pneg %p35
    %p42 = scmp.eq.s32.totalorder %s10, 1
    %p43 = por %p41, %p42
    %p44 = scmp.ne.s32.totalorder %s36, %s39
    %p45 = scmp.eq.s32.totalorder %s10, 0
    %p46 = por %p44, %p45
    %p47 = scmp.ne.s32.totalorder %s36, %s39
    %p48 = scmp.eq.s32.totalorder %s15, 1
    %p49 = por %p47, %p48
    %p50 = scmp.ne.s32.totalorder %s39, %s40
    %p51 = scmp.eq.s32.totalorder %s15, 0
    %p52 = por %p50, %p51
    %p53 = scmp.ne.s32.totalorder %s39, %s40
    %p54 = scmp.eq.s32.totalorder %s16, 1
    %p55 = por %p53, %p54
    %p57 = scmp.ne.s32.totalorder %s40, %s56
    %p58 = scmp.eq.s32.totalorder %s16, 0
    %p59 = por %p57, %p58
    %s61 = sadd.s32 %s60, 1
    %p64 = scmp.eq.s32.totalorder %s10, 1
    %p65 = scmp.ne.s32.totalorder %s60, %s62
    %p66 = scmp.eq.s32.totalorder %s10, 0
    %p67 = por %p65, %p66
    %p68 = scmp.ne.s32.totalorder %s60, %s62
    %p69 = scmp.eq.s32.totalorder %s15, 1
    %p70 = por %p68, %p69
    %p71 = scmp.ne.s32.totalorder %s62, %s63
    %p72 = scmp.eq.s32.totalorder %s15, 0
    %p73 = por %p71, %p72
    %p74 = scmp.ne.s32.totalorder %s62, %s63
    %p75 = scmp.eq.s32.totalorder %s16, 1
    %p76 = por %p74, %p75
    %p78 = scmp.ne.s32.totalorder %s63, %s77
    %p79 = scmp.eq.s32.totalorder %s16, 0
    %p80 = por %p78, %p79
    %s82 = sadd.s32 %s81, 1
    %p85 = scmp.eq.s32.totalorder %s10, 1
    %p86 = scmp.ne.s32.totalorder %s81, %s83
    %p87 = scmp.eq.s32.totalorder %s10, 0
    %p88 = por %p86, %p87
    %p89 = scmp.ne.s32.totalorder %s81, %s83
    %p90 = scmp.eq.s32.totalorder %s15, 1
    %p91 = por %p89, %p90
    %p92 = scmp.ne.s32.totalorder %s83, %s84
    %p93 = scmp.eq.s32.totalorder %s15, 0
    %p94 = por %p92, %p93
    %p95 = scmp.ne.s32.totalorder %s83, %s84
    %p96 = scmp.eq.s32.totalorder %s16, 1
    %p97 = por %p95, %p96
    %p99 = scmp.ne.s32.totalorder %s84, %s98
    %p100 = scmp.eq.s32.totalorder %s16, 0
    %p101 = por %p99, %p100
    %s103 = sadd.s32 %s102, 1
    %p106 = scmp.eq.s32.totalorder %s10, 1
    %p107 = scmp.ne.s32.totalorder %s102, %s104
    %p108 = scmp.eq.s32.totalorder %s10, 0
    %p109 = por %p107, %p108
    %p110 = scmp.ne.s32.totalorder %s102, %s104
    %p111 = scmp.eq.s32.totalorder %s15, 1
    %p112 = por %p110, %p111
    %p113 = scmp.ne.s32.totalorder %s104, %s105
    %p114 = scmp.eq.s32.totalorder %s15, 0
    %p115 = por %p113, %p114
    %p116 = scmp.ne.s32.totalorder %s104, %s105
    %p117 = scmp.eq.s32.totalorder %s16, 1
    %p118 = por %p116, %p117
    %p120 = scmp.ne.s32.totalorder %s105, %s119
    %p121 = scmp.eq.s32.totalorder %s16, 0
    %p122 = por %p120, %p121
    %s123 = smul.u32 %s18, %s17
    %s124 = smul.u32 %s25, %s29
    %s125 = ssub.s32 %s123, %s124
    %p126 = scmp.eq.s32.totalorder %s125, 0
    %s128 = sadd.s32 %s127, 1
    %s129 = scalar_select %p126, %s127, %s128
    %p132 = pneg %p126
    %p133 = scmp.eq.s32.totalorder %s10, 1
    %p134 = por %p132, %p133
    %p135 = scmp.ne.s32.totalorder %s127, %s130
    %p136 = scmp.eq.s32.totalorder %s10, 0
    %p137 = por %p135, %p136
    %p138 = scmp.ne.s32.totalorder %s127, %s130
    %p139 = scmp.eq.s32.totalorder %s15, 1
    %p140 = por %p138, %p139
    %p141 = scmp.ne.s32.totalorder %s130, %s131
    %p142 = scmp.eq.s32.totalorder %s15, 0
    %p143 = por %p141, %p142
    %p144 = scmp.ne.s32.totalorder %s130, %s131
    %p145 = scmp.eq.s32.totalorder %s16, 1
    %p146 = por %p144, %p145
    %p148 = scmp.ne.s32.totalorder %s131, %s147
    %p149 = scmp.eq.s32.totalorder %s16, 0
    %p150 = por %p148, %p149
    %p151 = scmp.le.s32.totalorder 1, %s10
    %p152 = scmp.lt.s32.totalorder %s10, 3
    %p153 = pnand %p151, %p152
    %p154 = pneg %p153
    // Predicated region
    $region9: #{discriminator_mnist_forward.5} parent=5 // pred_check
      _
    $region10: #{discriminator_mnist_forward.5} parent=5 // pred_check_branch
      %156 = sbr.rel (%p153) target = $region12
    $region11: #{discriminator_mnist_forward.5} parent=5 // pred_region
      %s157 = ssub.s32 %s10, 1
      // Predicated region
      $region13: #{discriminator_mnist_forward.5} parent=11 // pred_check
        %p158 = pneg %p73
      $region14: #{discriminator_mnist_forward.5} parent=11 // pred_check_branch
        %160 = sbr.rel (%p158) target = $region16
      $region15: #{discriminator_mnist_forward.5} parent=11 // pred_region
        _
      $region16: #{discriminator_mnist_forward.5} parent=11 // pred_fallthru
        _
      // Predicated region
      $region17: #{discriminator_mnist_forward.5} parent=11 // pred_check
        %p161 = pneg %p94
      $region18: #{discriminator_mnist_forward.5} parent=11 // pred_check_branch
        %163 = sbr.rel (%p161) target = $region20
      $region19: #{discriminator_mnist_forward.5} parent=11 // pred_region
        _
      $region20: #{discriminator_mnist_forward.5} parent=11 // pred_fallthru
        _
      // Predicated region
      $region21: #{discriminator_mnist_forward.5} parent=11 // pred_check
        %p164 = pneg %p115
      $region22: #{discriminator_mnist_forward.5} parent=11 // pred_check_branch
        %166 = sbr.rel (%p164) target = $region24
      $region23: #{discriminator_mnist_forward.5} parent=11 // pred_region
        _
      $region24: #{discriminator_mnist_forward.5} parent=11 // pred_fallthru
        _
    $region12: #{discriminator_mnist_forward.5} parent=5 // pred_fallthru
      _
    %p167 = scmp.lt.s32.totalorder %s10, 2
    // Predicated region
    $region25: #{discriminator_mnist_forward.5} parent=5 // pred_check
      %p168 = pneg %p167
    $region26: #{discriminator_mnist_forward.5} parent=5 // pred_check_branch
      %170 = sbr.rel (%p168) target = $region28
    $region27: #{discriminator_mnist_forward.5} parent=5 // pred_region
      // Predicated region
      $region29: #{discriminator_mnist_forward.5} parent=27 // pred_check
        %p171 = pneg %p46
      $region30: #{discriminator_mnist_forward.5} parent=27 // pred_check_branch
        %173 = sbr.rel (%p171) target = $region32
      $region31: #{discriminator_mnist_forward.5} parent=27 // pred_region
        %s174 = ssub.s32 1, %s17
        %s175 = smul.u32 %s18, %s174
        %p176 = scmp.lt.s32.totalorder %s175, 0
        %s177 = scalar_select %p176, %s175, 0
        %s178 = smul.addr %s177, 4
        %s179 = scalar_lea.vmem %s0, %s178
        %s180 = ssub.s32 1, %s17
        %s181 = smul.u32 %s18, %s180
      $region32: #{discriminator_mnist_forward.5} parent=27 // pred_fallthru
        _
    $region28: #{discriminator_mnist_forward.5} parent=5 // pred_fallthru
      _
    %p182 = scmp.le.s32.totalorder 1, %s10
    %p183 = scmp.lt.s32.totalorder %s10, 3
    %p184 = pnand %p182, %p183
    %p185 = pneg %p184
    // Predicated region
    $region33: #{discriminator_mnist_forward.5} parent=5 // pred_check
      _
    $region34: #{discriminator_mnist_forward.5} parent=5 // pred_check_branch
      %187 = sbr.rel (%p184) target = $region36
    $region35: #{discriminator_mnist_forward.5} parent=5 // pred_region
      %s188 = ssub.s32 %s10, 1
      %s189 = ssub.s32 1, %s19
      %s190 = smul.u32 %s20, %s189
      %p191 = scmp.lt.s32.totalorder %s190, 0
      %s192 = scalar_select %p191, %s190, 0
      %s193 = smul.addr %s192, 4
      %s194 = scalar_lea.vmem %s0, %s193
      %p195 = pneg %p52
      %p196 = pneg %p49
      %p197 = pneg %p73
      %p198 = pneg %p70
      %p199 = pneg %p94
      %p200 = pneg %p91
      %p201 = pneg %p115
      %p202 = pneg %p112
      %p203 = pneg %p143
      %p204 = pneg %p140
      %s205 = smul.u32 %s20, %s19
      %p206 = scmp.lt.s32.totalorder %s205, 0
      %s207 = scalar_select %p206, %s205, 0
      %s208 = smul.addr %s207, 4
      %s209 = scalar_lea.vmem %s4, %s208
      %s210 = ssub.s32 1, %s19
      %s211 = smul.u32 %s20, %s210
      %p212 = scmp.lt.s32.totalorder %s211, 0
      %s213 = scalar_select %p212, %s211, 0
      %s214 = smul.addr %s213, 4
      %s215 = scalar_lea.vmem %s0, %s214
      %s216 = ssub.s32 1, %s19
      %s217 = smul.u32 %s20, %s216
      %s218 = smul.u32 %s20, %s19
      %p219 = scmp.lt.s32.totalorder %s218, 0
      %s220 = scalar_select %p219, %s218, 0
      %s221 = smul.addr %s220, 4
      %s222 = scalar_lea.vmem %s4, %s221
      %s223 = smul.u32 %s20, %s19
      %p225 = scmp.eq.s32.totalorder %s19, 0
      %p226 = scmp.eq.s32.totalorder %s20, 0
      %p227 = pnand %p225, %p226
      %p228 = pneg %p227
      // Predicated region
      $region37: #{discriminator_mnist_forward.5} parent=35 // pred_check
        _
      $region38: #{discriminator_mnist_forward.5} parent=35 // pred_check_branch
        %230 = sbr.rel (%p227) target = $region40
      $region39: #{discriminator_mnist_forward.5} parent=35 // pred_region
        %vm231 = vcmask 7168
        %232 = vst.msk [vmem:[#allocation3] sm:$0xff] %vm231, 0.0
        %233 = vst.msk [vmem:[#allocation3 + $0x8] sm:$0xff] %vm231, 0.0
        %234 = vst.msk [vmem:[#allocation4] sm:$0xff] %vm231, 0.0
        %235 = vst.msk [vmem:[#allocation4 + $0x8] sm:$0xff] %vm231, 0.0
      $region40: #{discriminator_mnist_forward.5} parent=35 // pred_fallthru
        _
      // Predicated region
      $region41: #{discriminator_mnist_forward.5} parent=35 // pred_check
        %p236 = pneg %p225
      $region42: #{discriminator_mnist_forward.5} parent=35 // pred_check_branch
        %238 = sbr.rel (%p236) target = $region44
      $region43: #{discriminator_mnist_forward.5} parent=35 // pred_region
        %v239 = vld [vmem:[%s1] sm:$0xf]
        %v240 = vld [vmem:[%s1 + $0x4] sm:$0xf]
        %v241 = vld [vmem:[%s215] sm:$0xf]
        %v242 = vld [vmem:[%s215 + $0x4] sm:$0xf]
        %v243 = vld [vmem:[%s215 + $0x8] sm:$0xf]
        %v244 = vld [vmem:[%s215 + $0xc] sm:$0xf]
        %v245 = vld [vmem:[%s215 + $0x10] sm:$0xf]
        %v246 = vld [vmem:[%s215 + $0x14] sm:$0xf]
        %v247 = vld [vmem:[%s215 + $0x18] sm:$0xf]
        %v248 = vld [vmem:[%s215 + $0x1c] sm:$0xf]
        %v249 = vld [vmem:[%s215 + $0x20] sm:$0xf]
        %v250 = vld [vmem:[%s215 + $0x24] sm:$0xf]
        %v251 = vld [vmem:[%s215 + $0x28] sm:$0xf]
        %v252 = vld [vmem:[%s215 + $0x2c] sm:$0xf]
        %v253 = vld [vmem:[%s215 + $0x30] sm:$0xf]
        %v254 = vld [vmem:[%s215 + $0x34] sm:$0xf]
        %v255 = vld [vmem:[%s215 + $0x38] sm:$0xf]
        %v256 = vld [vmem:[%s215 + $0x3c] sm:$0xf]
        %v259 = vunpack.c.l.b16 %v239
        %v260 = vunpack.c.l.b16 %v240
        %v261 = vpack.c.b16 %v260, %v259
        %v279 = vunpack.c.l.b16 %v241
        %v280 = vunpack.c.l.b16 %v242
        %v281 = vunpack.c.l.b16 %v243
        %v282 = vunpack.c.l.b16 %v244
        %v283 = vunpack.c.l.b16 %v245
        %v284 = vunpack.c.l.b16 %v246
        %v285 = vunpack.c.l.b16 %v247
        %v286 = vunpack.c.l.b16 %v248
        %v287 = vunpack.c.l.b16 %v249
        %v288 = vunpack.c.l.b16 %v250
        %v289 = vunpack.c.l.b16 %v251
        %v290 = vunpack.c.l.b16 %v252
        %v291 = vunpack.c.l.b16 %v253
        %v292 = vunpack.c.l.b16 %v254
        %v293 = vunpack.c.l.b16 %v255
        %v294 = vunpack.c.l.b16 %v256
        %v295 = vpack.c.b16 %v280, %v279
        %v296 = vpack.c.b16 %v282, %v281
        %v297 = vpack.c.b16 %v284, %v283
        %v298 = vpack.c.b16 %v286, %v285
        %v299 = vpack.c.b16 %v288, %v287
        %v300 = vpack.c.b16 %v290, %v289
        %v301 = vpack.c.b16 %v292, %v291
        %v302 = vpack.c.b16 %v294, %v293
        %311 = vmatprep.subr.bf16.mxu0 0
        %312 = vmatpush1.bf16.msra.mxu0 %v295
        %313 = vmatprep.subr.bf16.mxu0 0
        %314 = vmatpush1.bf16.msra.mxu0 %v296
        %315 = vmatprep.subr.bf16.mxu0 0
        %316 = vmatpush1.bf16.msra.mxu0 %v297
        %317 = vmatprep.subr.bf16.mxu0 0
        %318 = vmatpush1.bf16.msra.mxu0 %v298
        %319 = vmatprep.subr.bf16.mxu0 0
        %320 = vmatpush1.bf16.msra.mxu0 %v299
        %321 = vmatprep.subr.bf16.mxu0 0
        %322 = vmatpush1.bf16.msra.mxu0 %v300
        %323 = vmatprep.subr.bf16.mxu0 0
        %324 = vmatpush1.bf16.msra.mxu0 %v301
        %325 = vmatprep.subr.bf16.mxu0 0
        %326 = vmatpush1.bf16.msra.mxu0 %v302
        %327 = vmatprep.subr.bf16.mxu0 0
        %328 = vmatpush1.bf16.msra.mxu0 0
        %329 = vmatprep.subr.bf16.mxu0 0
        %330 = vmatpush1.bf16.msra.mxu0 0
        %331 = vmatprep.subr.bf16.mxu0 0
        %332 = vmatpush1.bf16.msra.mxu0 0
        %333 = vmatprep.subr.bf16.mxu0 0
        %334 = vmatpush1.bf16.msra.mxu0 0
        %335 = vmatprep.subr.bf16.mxu0 0
        %336 = vmatpush1.bf16.msra.mxu0 0
        %337 = vmatprep.subr.bf16.mxu0 0
        %338 = vmatpush1.bf16.msra.mxu0 0
        %339 = vmatprep.subr.bf16.mxu0 0
        %340 = vmatpush1.bf16.msra.mxu0 0
        %341 = vmatprep.subr.bf16.mxu0 0
        %342 = vmatpush1.bf16.msra.mxu0 0
        %343 = vmatprep.mubr.bf16.mxu0 0
        %344 = vmatmul.mubr.bf16.gmra.mrb[0].mxu0 %v261
        %v345 = vpop.f32.mrb[0].mxu0
        %v346 = vadd.f32 0.0, %v345
        %v347 = vpop.f32.mrb[0].mxu0
        %v348 = vpop.f32.mrb[0].mxu0
        %v349 = vadd.f32 0.0, %v348
        %v350 = vpop.f32.mrb[0].mxu0
        %351 = vdwg.mxu0
        %s352 = smul.u32 %s20, 16
        %s353 = scalar_lea.vmem [#allocation2], %s352
        %vm354 = vcmask 801792
        %355 = vst.msk [vmem:[%s353] sm:$0xff] %vm354, %v346
        %356 = vst.msk [vmem:[%s353 + $0x8] sm:$0xff] %vm354, %v349
        %v357 = vld [vmem:[#allocation3] sm:$0xff]
        %v358 = vld [vmem:[#allocation3 + $0x8] sm:$0xff]
        %v359 = vsel %vm354, %v346, 0.0
        %360 = vadd.xlane.f32.xlu0 %v359
        %v361 = vpop.xlane.xlu0 %360
        %v362 = vsel %vm354, %v349, 0.0
        %363 = vadd.xlane.f32.xlu0 %v362
        %v364 = vpop.xlane.xlu0 %363
        %v365 = vadd.f32 %v357, %v361
        %v366 = vadd.f32 %v358, %v364
        %vm367 = vcmask 7168
        %368 = vst.msk [vmem:[#allocation3] sm:$0xff] %vm367, %v365
        %369 = vst.msk [vmem:[#allocation3 + $0x8] sm:$0xff] %vm367, %v366
        %v370 = vld [vmem:[#allocation4] sm:$0xff]
        %v371 = vld [vmem:[#allocation4 + $0x8] sm:$0xff]
        %v372 = vmul.f32 %v346, %v346
        %v373 = vmul.f32 %v349, %v349
        %v374 = vsel %vm354, %v372, 0.0
        %375 = vadd.xlane.f32.xlu0 %v374
        %v376 = vpop.xlane.xlu0 %375
        %v377 = vsel %vm354, %v373, 0.0
        %378 = vadd.xlane.f32.xlu0 %v377
        %v379 = vpop.xlane.xlu0 %378
        %v380 = vadd.f32 %v370, %v376
        %v381 = vadd.f32 %v371, %v379
        %382 = vst.msk [vmem:[#allocation4] sm:$0xff] %vm367, %v380
        %383 = vst.msk [vmem:[#allocation4 + $0x8] sm:$0xff] %vm367, %v381
      $region44: #{discriminator_mnist_forward.5} parent=35 // pred_fallthru
        _
      %p384 = scmp.eq.s32.totalorder %s19, 1
      // Predicated region
      $region45: #{discriminator_mnist_forward.5} parent=35 // pred_check
        %p385 = pneg %p384
      $region46: #{discriminator_mnist_forward.5} parent=35 // pred_check_branch
        %387 = sbr.rel (%p385) target = $region48
      $region47: #{discriminator_mnist_forward.5} parent=35 // pred_region
        %v388 = vld [vmem:[#allocation3] sm:$0xff]
        %v389 = vld [vmem:[#allocation3 + $0x8] sm:$0xff]
        %v390 = vmul.f32 %v388, 0.010204081
        %v391 = vmul.f32 %v389, 0.010204081
        %v392 = vld [vmem:[#allocation4] sm:$0xff]
        %v393 = vld [vmem:[#allocation4 + $0x8] sm:$0xff]
        %v394 = vmul.f32 %v392, 0.010204081
        %v395 = vmul.f32 %v393, 0.010204081
        %v396 = vmul.f32 %v390, %v390
        %v397 = vmul.f32 %v391, %v391
        %v398 = vsub.f32 %v394, %v396
        %v399 = vsub.f32 %v395, %v397
        %v400 = vmax.f32 %v398, 0.0
        %v401 = vmax.f32 %v399, 0.0
        %s402 = smul.u32 %s20, 16
        %s403 = scalar_lea.vmem [#allocation2], %s402
        %v404 = vld [vmem:[%s403] sm:$0xff]
        %v405 = vld [vmem:[%s403 + $0x8] sm:$0xff]
        %407 = vset.pattern.permute.xlu0 0
        %408 = vperm.xlu0 %407, %v390
        %v409 = vpop.permute.xlu0 %408
        %412 = vset.pattern.permute.xlu0 0
        %413 = vperm.xlu0 %412, %v391
        %v414 = vpop.permute.xlu0 %413
        %v416 = vsub.f32 %v404, %v409
        %v417 = vsub.f32 %v405, %v414
        %v418 = vadd.f32 %v400, 1e-05
        %v419 = vadd.f32 %v401, 1e-05
        %v420 = vrsqrt.pop %v418
        %v421 = vrsqrt.pop %v419
        %423 = vset.pattern.permute.xlu0 0
        %424 = vperm.xlu0 %423, %v420
        %v425 = vpop.permute.xlu0 %424
        %428 = vset.pattern.permute.xlu0 0
        %429 = vperm.xlu0 %428, %v421
        %v430 = vpop.permute.xlu0 %429
        %v432 = vmul.f32 %v416, %v425
        %v433 = vmul.f32 %v417, %v430
        %v434 = vld [vmem:[%s2] sm:$0xff]
        %v435 = vld [vmem:[%s2 + $0x8] sm:$0xff]
        %437 = vset.pattern.permute.xlu0 0
        %438 = vperm.xlu0 %437, %v434
        %v439 = vpop.permute.xlu0 %438
        %442 = vset.pattern.permute.xlu0 0
        %443 = vperm.xlu0 %442, %v435
        %v444 = vpop.permute.xlu0 %443
        %v446 = vmul.f32 %v432, %v439
        %v447 = vmul.f32 %v433, %v444
        %v448 = vld [vmem:[%s3] sm:$0xff]
        %v449 = vld [vmem:[%s3 + $0x8] sm:$0xff]
        %451 = vset.pattern.permute.xlu0 0
        %452 = vperm.xlu0 %451, %v448
        %v453 = vpop.permute.xlu0 %452
        %456 = vset.pattern.permute.xlu0 0
        %457 = vperm.xlu0 %456, %v449
        %v458 = vpop.permute.xlu0 %457
        %v460 = vadd.f32 %v446, %v453
        %v461 = vadd.f32 %v447, %v458
        %vm462 = vcmp.ge.f32.partialorder %v460, 0.0
        %vm463 = vcmp.ge.f32.partialorder %v461, 0.0
        %v464 = vmul.f32 %v460, 0.2
        %v465 = vmul.f32 %v461, 0.2
        %v466 = vsel %vm462, %v460, %v464
        %v467 = vsel %vm463, %v461, %v465
        %v468 = vpack.c.bf16 %v467, %v466
        %v470 = vunpack.c.l.b16 %v468
        %v471 = vunpack.c.h.b16 %v468
        %v472 = vpack.c.b16 %v470, %v470
        %v473 = vpack.c.b16 %v471, %v471
        %vm476 = vcmask 797696
        %477 = vst.msk [vmem:[%s222] sm:$0xf] %vm476, %v472
        %478 = vst.msk [vmem:[%s222 + $0x4] sm:$0xf] %vm476, %v473
      $region48: #{discriminator_mnist_forward.5} parent=35 // pred_fallthru
        _
      %s479 = smul.u32 %s20, %s19
      %p480 = scmp.lt.s32.totalorder %s479, 0
      %s481 = scalar_select %p480, %s479, 0
      %s482 = smul.addr %s481, 4
      %s483 = scalar_lea.vmem %s4, %s482
      // Predicated region
      $region49: #{discriminator_mnist_forward.5} parent=35 // pred_check
        %p484 = pneg %p140
      $region50: #{discriminator_mnist_forward.5} parent=35 // pred_check_branch
        %486 = sbr.rel (%p484) target = $region52
      $region51: #{discriminator_mnist_forward.5} parent=35 // pred_region
        %s487 = smul.u32 %s20, %s19
      $region52: #{discriminator_mnist_forward.5} parent=35 // pred_fallthru
        _
    $region36: #{discriminator_mnist_forward.5} parent=5 // pred_fallthru
      _
    %p488 = scmp.le.s32.totalorder 2, %s10
    // Predicated region
    $region53: #{discriminator_mnist_forward.5} parent=5 // pred_check
      %p489 = pneg %p488
    $region54: #{discriminator_mnist_forward.5} parent=5 // pred_check_branch
      %491 = sbr.rel (%p489) target = $region56
    $region55: #{discriminator_mnist_forward.5} parent=5 // pred_region
      %s492 = ssub.s32 %s10, 2
      // Predicated region
      $region57: #{discriminator_mnist_forward.5} parent=55 // pred_check
        %p493 = pneg %p146
      $region58: #{discriminator_mnist_forward.5} parent=55 // pred_check_branch
        %495 = sbr.rel (%p493) target = $region60
      $region59: #{discriminator_mnist_forward.5} parent=55 // pred_region
        %s496 = smul.u32 %s22, %s21
        %p497 = scmp.lt.s32.totalorder %s496, 0
        %s498 = scalar_select %p497, %s496, 0
        %s499 = smul.addr %s498, 4
        %s500 = scalar_lea.vmem %s4, %s499
      $region60: #{discriminator_mnist_forward.5} parent=55 // pred_fallthru
        _
    $region56: #{discriminator_mnist_forward.5} parent=5 // pred_fallthru
      _
  $region6: #{discriminator_mnist_forward.5} parent=0 // loop_footer
    %s14 = sadd.s32 1, %s10
  $region7: #{discriminator_mnist_forward.5} parent=0 // loop_footer_branch
    %9 = sbr.rel target = $region3
  $region8: #{discriminator_mnist_forward.5} parent=0 // loop_exit
    _

// kernel: discriminator_mnist_forward.7
$region0: #{discriminator_mnist_forward.7}
  #allocation0 [shape = 'u32[]', space=smem, size = 0x4, offset = 0x4, fixed_abs, tag = 'smem constant byte address 0x4 - core index']
  #allocation1 [shape = 'u32[144,128]{1,0:T(1,128)}', space=vmem, size = 0x12000, scoped, tag = 'internal scratch']
  %s0 = inlined_call_operand.vmem [shape: bf16[288,2], index: 0, kind: input, shape index: {}]
  %s1 = inlined_call_operand.vmem [shape: bf16[1,288], index: 1, kind: input, shape index: {}]
  %s2 = inlined_call_operand.hbm [shape: f32[1,2], index: 2, kind: output, shape index: {}]
  %s3 = sld [smem:[#allocation0]]
  $region18: #{discriminator_mnist_forward.7} parent=0
    _
  %s5 = ssub.s32 1, %s3
  %s6 = scalar_select 0, %s5, %s3
  $region1: #{discriminator_mnist_forward.7} parent=0
    #allocation2 [shape = 'u8[512]{0}', space=vmem, size = 0x400, scoped, tag = 'output window, operand 0, single buffered']
    #allocation3 [shape = 's32[1]{0}', space=sflag, size = 0x4, scoped, tag = 'scoped memory for discriminator_mnist_forward.7']
    %7 = vsyncpa [#allocation3], 0
    // Predicated region
    $region2: #{discriminator_mnist_forward.7} parent=1 // pred_check
      _
    $region3: #{discriminator_mnist_forward.7} parent=1 // pred_check_branch
      %9 = sbr.rel (0) target = $region5
    $region4: #{discriminator_mnist_forward.7} parent=1 // pred_region
      _
    $region5: #{discriminator_mnist_forward.7} parent=1 // pred_fallthru
      _
    // Predicated region
    $region6: #{discriminator_mnist_forward.7} parent=1 // pred_check
      _
    $region7: #{discriminator_mnist_forward.7} parent=1 // pred_check_branch
      %11 = sbr.rel (0) target = $region9
    $region8: #{discriminator_mnist_forward.7} parent=1 // pred_region
      _
    $region9: #{discriminator_mnist_forward.7} parent=1 // pred_fallthru
      _
    %v13 = vld [vmem:[%s1] sm:$0x7]
    %v14 = vld [vmem:[%s0] sm:$0xf]
    %v15 = vld [vmem:[%s0 + $0x4] sm:$0xf]
    %v16 = vld [vmem:[%s0 + $0x8] sm:$0xf]
    %v17 = vld [vmem:[%s0 + $0xc] sm:$0xf]
    %v18 = vld [vmem:[%s0 + $0x10] sm:$0xf]
    %v19 = vld [vmem:[%s0 + $0x14] sm:$0xf]
    %v20 = vld [vmem:[%s0 + $0x18] sm:$0xf]
    %v21 = vld [vmem:[%s0 + $0x1c] sm:$0xf]
    %v22 = vld [vmem:[%s0 + $0x20] sm:$0xf]
    %v23 = vld [vmem:[%s0 + $0x24] sm:$0xf]
    %v24 = vld [vmem:[%s0 + $0x28] sm:$0xf]
    %v25 = vld [vmem:[%s0 + $0x2c] sm:$0xf]
    %v26 = vld [vmem:[%s0 + $0x30] sm:$0xf]
    %v27 = vld [vmem:[%s0 + $0x34] sm:$0xf]
    %v28 = vld [vmem:[%s0 + $0x38] sm:$0xf]
    %v29 = vld [vmem:[%s0 + $0x3c] sm:$0xf]
    %v30 = vld [vmem:[%s0 + $0x40] sm:$0xf]
    %v31 = vld [vmem:[%s0 + $0x44] sm:$0xf]
    %v32 = vld [vmem:[%s0 + $0x48] sm:$0xf]
    %v33 = vld [vmem:[%s0 + $0x4c] sm:$0xf]
    %v34 = vld [vmem:[%s0 + $0x50] sm:$0xf]
    %v35 = vld [vmem:[%s0 + $0x54] sm:$0xf]
    %v36 = vld [vmem:[%s0 + $0x58] sm:$0xf]
    %v37 = vld [vmem:[%s0 + $0x5c] sm:$0xf]
    %v38 = vld [vmem:[%s0 + $0x60] sm:$0xf]
    %v39 = vld [vmem:[%s0 + $0x64] sm:$0xf]
    %v40 = vld [vmem:[%s0 + $0x68] sm:$0xf]
    %v41 = vld [vmem:[%s0 + $0x6c] sm:$0xf]
    %v42 = vld [vmem:[%s0 + $0x70] sm:$0xf]
    %v43 = vld [vmem:[%s0 + $0x74] sm:$0xf]
    %v44 = vld [vmem:[%s0 + $0x78] sm:$0xf]
    %v45 = vld [vmem:[%s0 + $0x7c] sm:$0xf]
    %v46 = vld [vmem:[%s0 + $0x80] sm:$0xf]
    %v47 = vld [vmem:[%s0 + $0x84] sm:$0xf]
    %v48 = vld [vmem:[%s0 + $0x88] sm:$0xf]
    %v49 = vld [vmem:[%s0 + $0x8c] sm:$0xf]
    %v52 = vunpack.c.l.s4 1966171168
    %v53 = vunpack.c.0.s8 %v52
    %v54 = vlaneseq
    %v55 = vshrl.u32 %v54, 7
    %v56 = vsub.s32 %v53, %v55
    %v57 = vrot.slane %v13, %v56
    %v58 = vcombine.high %v57, %v57
    %v60 = vunpack.c.l.s4 1966171168
    %v61 = vunpack.c.0.s8 %v60
    %v62 = vlaneseq
    %v63 = vshrl.u32 %v62, 7
    %v64 = vsub.s32 %v61, %v63
    %v65 = vrot.slane %v57, %v64
    %v67 = vunpack.c.l.s4 1966171168
    %v68 = vunpack.c.0.s8 %v67
    %v69 = vlaneseq
    %v70 = vshrl.u32 %v69, 7
    %v71 = vsub.s32 %v68, %v70
    %v72 = vrot.slane %v58, %v71
    %v73 = vcombine.high %v65, %v65
    %v112 = vunpack.c.l.b16 %v14
    %v113 = vunpack.c.l.b16 %v15
    %v114 = vunpack.c.l.b16 %v16
    %v115 = vunpack.c.l.b16 %v17
    %v116 = vunpack.c.l.b16 %v18
    %v117 = vunpack.c.l.b16 %v19
    %v118 = vunpack.c.l.b16 %v20
    %v119 = vunpack.c.l.b16 %v21
    %v120 = vunpack.c.l.b16 %v22
    %v121 = vunpack.c.l.b16 %v23
    %v122 = vunpack.c.l.b16 %v24
    %v123 = vunpack.c.l.b16 %v25
    %v124 = vunpack.c.l.b16 %v26
    %v125 = vunpack.c.l.b16 %v27
    %v126 = vunpack.c.l.b16 %v28
    %v127 = vunpack.c.l.b16 %v29
    %v128 = vunpack.c.l.b16 %v30
    %v129 = vunpack.c.l.b16 %v31
    %v130 = vunpack.c.l.b16 %v32
    %v131 = vunpack.c.l.b16 %v33
    %v132 = vunpack.c.l.b16 %v34
    %v133 = vunpack.c.l.b16 %v35
    %v134 = vunpack.c.l.b16 %v36
    %v135 = vunpack.c.l.b16 %v37
    %v136 = vunpack.c.l.b16 %v38
    %v137 = vunpack.c.l.b16 %v39
    %v138 = vunpack.c.l.b16 %v40
    %v139 = vunpack.c.l.b16 %v41
    %v140 = vunpack.c.l.b16 %v42
    %v141 = vunpack.c.l.b16 %v43
    %v142 = vunpack.c.l.b16 %v44
    %v143 = vunpack.c.l.b16 %v45
    %v144 = vunpack.c.l.b16 %v46
    %v145 = vunpack.c.l.b16 %v47
    %v146 = vunpack.c.l.b16 %v48
    %v147 = vunpack.c.l.b16 %v49
    %v148 = vpack.c.b16 %v113, %v112
    %v149 = vpack.c.b16 %v115, %v114
    %v150 = vpack.c.b16 %v117, %v116
    %v151 = vpack.c.b16 %v119, %v118
    %v152 = vpack.c.b16 %v121, %v120
    %v153 = vpack.c.b16 %v123, %v122
    %v154 = vpack.c.b16 %v125, %v124
    %v155 = vpack.c.b16 %v127, %v126
    %v156 = vpack.c.b16 %v129, %v128
    %v157 = vpack.c.b16 %v131, %v130
    %v158 = vpack.c.b16 %v133, %v132
    %v159 = vpack.c.b16 %v135, %v134
    %v160 = vpack.c.b16 %v137, %v136
    %v161 = vpack.c.b16 %v139, %v138
    %v162 = vpack.c.b16 %v141, %v140
    %v163 = vpack.c.b16 %v143, %v142
    %v164 = vpack.c.b16 %v145, %v144
    %v165 = vpack.c.b16 %v147, %v146
    %vm184 = vcmask 261120
    %v186 = vsel %vm184, %v73, 0
    %188 = vmatprep.subr.bf16.mxu0 0
    %189 = vmatpush1.bf16.msra.mxu0 %v148
    %190 = vmatprep.subr.bf16.mxu0 0
    %191 = vmatpush1.bf16.msra.mxu0 %v149
    %192 = vmatprep.subr.bf16.mxu0 0
    %193 = vmatpush1.bf16.msra.mxu0 %v150
    %194 = vmatprep.subr.bf16.mxu0 0
    %195 = vmatpush1.bf16.msra.mxu0 %v151
    %196 = vmatprep.subr.bf16.mxu0 0
    %197 = vmatpush1.bf16.msra.mxu0 %v152
    %198 = vmatprep.subr.bf16.mxu0 0
    %199 = vmatpush1.bf16.msra.mxu0 %v153
    %200 = vmatprep.subr.bf16.mxu0 0
    %201 = vmatpush1.bf16.msra.mxu0 %v154
    %202 = vmatprep.subr.bf16.mxu0 0
    %203 = vmatpush1.bf16.msra.mxu0 %v155
    %204 = vmatprep.subr.bf16.mxu0 0
    %205 = vmatpush1.bf16.msra.mxu0 %v156
    %206 = vmatprep.subr.bf16.mxu0 0
    %207 = vmatpush1.bf16.msra.mxu0 %v157
    %208 = vmatprep.subr.bf16.mxu0 0
    %209 = vmatpush1.bf16.msra.mxu0 %v158
    %210 = vmatprep.subr.bf16.mxu0 0
    %211 = vmatpush1.bf16.msra.mxu0 %v159
    %212 = vmatprep.subr.bf16.mxu0 0
    %213 = vmatpush1.bf16.msra.mxu0 %v160
    %214 = vmatprep.subr.bf16.mxu0 0
    %215 = vmatpush1.bf16.msra.mxu0 %v161
    %216 = vmatprep.subr.bf16.mxu0 0
    %217 = vmatpush1.bf16.msra.mxu0 %v162
    %218 = vmatprep.subr.bf16.mxu0 0
    %219 = vmatpush1.bf16.msra.mxu0 %v163
    %220 = vmatprep.mubr.bf16.mxu0 %v72
    %221 = vmatmul.mubr.bf16.gmra.mrb[0].mxu0 %v65
    %v222 = vpop.f32.mrb[0].mxu0
    %v223 = vadd.f32 0.0, %v222
    %v224 = vpop.f32.mrb[0].mxu0
    %v225 = vpop.f32.mrb[0].mxu0
    %v226 = vpop.f32.mrb[0].mxu0
    %227 = vdwg.mxu0
    %228 = vmatprep.subr.bf16.mxu0 0
    %229 = vmatpush1.bf16.msra.mxu0 %v164
    %230 = vmatprep.subr.bf16.mxu0 0
    %231 = vmatpush1.bf16.msra.mxu0 %v165
    %232 = vmatprep.subr.bf16.mxu0 0
    %233 = vmatpush1.bf16.msra.mxu0 0
    %234 = vmatprep.subr.bf16.mxu0 0
    %235 = vmatpush1.bf16.msra.mxu0 0
    %236 = vmatprep.subr.bf16.mxu0 0
    %237 = vmatpush1.bf16.msra.mxu0 0
    %238 = vmatprep.subr.bf16.mxu0 0
    %239 = vmatpush1.bf16.msra.mxu0 0
    %240 = vmatprep.subr.bf16.mxu0 0
    %241 = vmatpush1.bf16.msra.mxu0 0
    %242 = vmatprep.subr.bf16.mxu0 0
    %243 = vmatpush1.bf16.msra.mxu0 0
    %244 = vmatprep.subr.bf16.mxu0 0
    %245 = vmatpush1.bf16.msra.mxu0 0
    %246 = vmatprep.subr.bf16.mxu0 0
    %247 = vmatpush1.bf16.msra.mxu0 0
    %248 = vmatprep.subr.bf16.mxu0 0
    %249 = vmatpush1.bf16.msra.mxu0 0
    %250 = vmatprep.subr.bf16.mxu0 0
    %251 = vmatpush1.bf16.msra.mxu0 0
    %252 = vmatprep.subr.bf16.mxu0 0
    %253 = vmatpush1.bf16.msra.mxu0 0
    %254 = vmatprep.subr.bf16.mxu0 0
    %255 = vmatpush1.bf16.msra.mxu0 0
    %256 = vmatprep.subr.bf16.mxu0 0
    %257 = vmatpush1.bf16.msra.mxu0 0
    %258 = vmatprep.subr.bf16.mxu0 0
    %259 = vmatpush1.bf16.msra.mxu0 0
    %260 = vmatprep.mubr.bf16.mxu0 0
    %261 = vmatmul.mubr.bf16.gmra.mrb[0].mxu0 %v186
    %v262 = vpop.f32.mrb[0].mxu0
    %v263 = vadd.f32 %v223, %v262
    %v264 = vpop.f32.mrb[0].mxu0
    %v265 = vpop.f32.mrb[0].mxu0
    %v266 = vpop.f32.mrb[0].mxu0
    %267 = vdwg.mxu0
    %v268 = vsub.f32 0.0, %v263
    %v269 = vmul.f32 %v268, 1.442695
    %v270 = vpow.pop %v269
    %v271 = vadd.f32 %v270, 1.0
    %v272 = vrcp.pop %v271
    %vm273 = vcmask 8192
    %274 = vst.msk [vmem:[#allocation2] sm:$0x1] %vm273, %v272
    // Predicated region
    $region10: #{discriminator_mnist_forward.7} parent=1 // pred_check
      _
    $region11: #{discriminator_mnist_forward.7} parent=1 // pred_check_branch
      %276 = sbr.rel (0) target = $region13
    $region12: #{discriminator_mnist_forward.7} parent=1 // pred_region
      %s278 = ssub.s32 16, 16
      %279 = vsyncadd [#allocation3], %s278
      %s281 = sshll.u32 [#allocation2], 4
      %s282 = int_to_ptr.vmem [resolvable:$true] %s281
      %284 = dma.vmem_to_hbm [thread:$0]  %s282, 16, %s2, [#allocation3]
    $region13: #{discriminator_mnist_forward.7} parent=1 // pred_fallthru
      _
    // Predicated region
    $region14: #{discriminator_mnist_forward.7} parent=1 // pred_check
      _
    $region15: #{discriminator_mnist_forward.7} parent=1 // pred_check_branch
      %286 = sbr.rel (0) target = $region17
    $region16: #{discriminator_mnist_forward.7} parent=1 // pred_region
      %287 = dma.done [#allocation3], 16
    $region17: #{discriminator_mnist_forward.7} parent=1 // pred_fallthru
      _
    %288 = vsyncpa [#allocation3], 1

// kernel: discriminator_mnist_forward.6
$region0: #{discriminator_mnist_forward.6}
  #allocation0 [shape = 'u32[]', space=smem, size = 0x4, offset = 0x4, fixed_abs, tag = 'smem constant byte address 0x4 - core index']
  #allocation1 [shape = 'u32[144,128]{1,0:T(1,128)}', space=vmem, size = 0x12000, scoped, tag = 'internal scratch']
  #allocation2 [shape = 'f32[1,32,18]{2,1,0:T(8,128)}', space=vmem, size = 0x4000, scoped, tag = 'scratch operand']
  #allocation3 [shape = 'f32[32,1]{1,0:T(8,128)}', space=vmem, size = 0x4000, scoped, tag = 'scratch operand']
  #allocation4 [shape = 'f32[32,1]{1,0:T(8,128)}', space=vmem, size = 0x4000, scoped, tag = 'scratch operand']
  %s0 = inlined_call_operand.vmem [shape: bf16[256,18], index: 0, kind: input, shape index: {}]
  %s1 = inlined_call_operand.vmem [shape: bf16[32,256], index: 1, kind: input, shape index: {}]
  %s2 = inlined_call_operand.vmem [shape: f32[32,1], index: 2, kind: input, shape index: {}]
  %s3 = inlined_call_operand.vmem [shape: f32[32,1], index: 3, kind: input, shape index: {}]
  %s4 = inlined_call_operand.vmem [shape: bf16[32,18], index: 4, kind: output, shape index: {}]
  %s5 = sld [smem:[#allocation0]]
  $region61: #{discriminator_mnist_forward.6} parent=0
    _
  %s7 = ssub.s32 1, %s5
  %s8 = scalar_select 0, %s7, %s5
  loop: start=0, step=1, limit=4
  $region2: #{discriminator_mnist_forward.6} parent=0 // loop_pre_header
    _
  $region3: #{discriminator_mnist_forward.6} parent=0 // loop_header
    %s10 = sphi 0, %s14
    %p11 = scmp.ge.s32.totalorder %s10, 4
    %s17 = sphi 0, %s29
    %s18 = sphi 0, %s25
    %s19 = sphi 0, %s17
    %s20 = sphi 0, %s18
    %s21 = sphi 0, %s19
    %s22 = sphi 0, %s20
    %s36 = sphi 0, %s38
    %s39 = sphi 0, %s36
    %s40 = sphi 0, %s39
    %s56 = sphi 0, %s40
    %s60 = sphi 0, %s60
    %s62 = sphi 0, %s60
    %s63 = sphi 0, %s62
    %s77 = sphi 0, %s63
    %s81 = sphi 0, %s81
    %s83 = sphi 0, %s81
    %s84 = sphi 0, %s83
    %s98 = sphi 0, %s84
    %s102 = sphi 0, %s102
    %s104 = sphi 0, %s102
    %s105 = sphi 0, %s104
    %s119 = sphi 0, %s105
    %s127 = sphi 0, %s129
    %s130 = sphi 0, %s127
    %s131 = sphi 0, %s130
    %s147 = sphi 0, %s131
  $region4: #{discriminator_mnist_forward.6} parent=0 // loop_header_branch
    %13 = sbr.rel (%p11) target = $region8
  $region5: #{discriminator_mnist_forward.6} parent=0 // loop_body
    %s15 = ssub.s32 %s10, 1
    %s16 = ssub.s32 %s10, 2
    %s23 = sadd.s32 1, %s18
    %p24 = scmp.ge.s32.totalorder %s23, 1
    %s25 = scalar_select %p24, 0, %s23
    %s26 = sadd.s32 1, %s17
    %s27 = scalar_select %p24, %s26, %s17
    %p28 = scmp.ge.s32.totalorder %s27, 2
    %s29 = scalar_select %p28, 0, %s27
    %s30 = ssub.s32 1, %s17
    %s31 = smul.u32 %s18, %s30
    %s32 = ssub.s32 1, %s29
    %s33 = smul.u32 %s25, %s32
    %s34 = ssub.s32 %s31, %s33
    %p35 = scmp.eq.s32.totalorder %s34, 0
    %s37 = sadd.s32 %s36, 1
    %s38 = scalar_select %p35, %s36, %s37
    %p41 = pneg %p35
    %p42 = scmp.eq.s32.totalorder %s10, 1
    %p43 = por %p41, %p42
    %p44 = scmp.ne.s32.totalorder %s36, %s39
    %p45 = scmp.eq.s32.totalorder %s10, 0
    %p46 = por %p44, %p45
    %p47 = scmp.ne.s32.totalorder %s36, %s39
    %p48 = scmp.eq.s32.totalorder %s15, 1
    %p49 = por %p47, %p48
    %p50 = scmp.ne.s32.totalorder %s39, %s40
    %p51 = scmp.eq.s32.totalorder %s15, 0
    %p52 = por %p50, %p51
    %p53 = scmp.ne.s32.totalorder %s39, %s40
    %p54 = scmp.eq.s32.totalorder %s16, 1
    %p55 = por %p53, %p54
    %p57 = scmp.ne.s32.totalorder %s40, %s56
    %p58 = scmp.eq.s32.totalorder %s16, 0
    %p59 = por %p57, %p58
    %s61 = sadd.s32 %s60, 1
    %p64 = scmp.eq.s32.totalorder %s10, 1
    %p65 = scmp.ne.s32.totalorder %s60, %s62
    %p66 = scmp.eq.s32.totalorder %s10, 0
    %p67 = por %p65, %p66
    %p68 = scmp.ne.s32.totalorder %s60, %s62
    %p69 = scmp.eq.s32.totalorder %s15, 1
    %p70 = por %p68, %p69
    %p71 = scmp.ne.s32.totalorder %s62, %s63
    %p72 = scmp.eq.s32.totalorder %s15, 0
    %p73 = por %p71, %p72
    %p74 = scmp.ne.s32.totalorder %s62, %s63
    %p75 = scmp.eq.s32.totalorder %s16, 1
    %p76 = por %p74, %p75
    %p78 = scmp.ne.s32.totalorder %s63, %s77
    %p79 = scmp.eq.s32.totalorder %s16, 0
    %p80 = por %p78, %p79
    %s82 = sadd.s32 %s81, 1
    %p85 = scmp.eq.s32.totalorder %s10, 1
    %p86 = scmp.ne.s32.totalorder %s81, %s83
    %p87 = scmp.eq.s32.totalorder %s10, 0
    %p88 = por %p86, %p87
    %p89 = scmp.ne.s32.totalorder %s81, %s83
    %p90 = scmp.eq.s32.totalorder %s15, 1
    %p91 = por %p89, %p90
    %p92 = scmp.ne.s32.totalorder %s83, %s84
    %p93 = scmp.eq.s32.totalorder %s15, 0
    %p94 = por %p92, %p93
    %p95 = scmp.ne.s32.totalorder %s83, %s84
    %p96 = scmp.eq.s32.totalorder %s16, 1
    %p97 = por %p95, %p96
    %p99 = scmp.ne.s32.totalorder %s84, %s98
    %p100 = scmp.eq.s32.totalorder %s16, 0
    %p101 = por %p99, %p100
    %s103 = sadd.s32 %s102, 1
    %p106 = scmp.eq.s32.totalorder %s10, 1
    %p107 = scmp.ne.s32.totalorder %s102, %s104
    %p108 = scmp.eq.s32.totalorder %s10, 0
    %p109 = por %p107, %p108
    %p110 = scmp.ne.s32.totalorder %s102, %s104
    %p111 = scmp.eq.s32.totalorder %s15, 1
    %p112 = por %p110, %p111
    %p113 = scmp.ne.s32.totalorder %s104, %s105
    %p114 = scmp.eq.s32.totalorder %s15, 0
    %p115 = por %p113, %p114
    %p116 = scmp.ne.s32.totalorder %s104, %s105
    %p117 = scmp.eq.s32.totalorder %s16, 1
    %p118 = por %p116, %p117
    %p120 = scmp.ne.s32.totalorder %s105, %s119
    %p121 = scmp.eq.s32.totalorder %s16, 0
    %p122 = por %p120, %p121
    %s123 = smul.u32 %s18, %s17
    %s124 = smul.u32 %s25, %s29
    %s125 = ssub.s32 %s123, %s124
    %p126 = scmp.eq.s32.totalorder %s125, 0
    %s128 = sadd.s32 %s127, 1
    %s129 = scalar_select %p126, %s127, %s128
    %p132 = pneg %p126
    %p133 = scmp.eq.s32.totalorder %s10, 1
    %p134 = por %p132, %p133
    %p135 = scmp.ne.s32.totalorder %s127, %s130
    %p136 = scmp.eq.s32.totalorder %s10, 0
    %p137 = por %p135, %p136
    %p138 = scmp.ne.s32.totalorder %s127, %s130
    %p139 = scmp.eq.s32.totalorder %s15, 1
    %p140 = por %p138, %p139
    %p141 = scmp.ne.s32.totalorder %s130, %s131
    %p142 = scmp.eq.s32.totalorder %s15, 0
    %p143 = por %p141, %p142
    %p144 = scmp.ne.s32.totalorder %s130, %s131
    %p145 = scmp.eq.s32.totalorder %s16, 1
    %p146 = por %p144, %p145
    %p148 = scmp.ne.s32.totalorder %s131, %s147
    %p149 = scmp.eq.s32.totalorder %s16, 0
    %p150 = por %p148, %p149
    %p151 = scmp.le.s32.totalorder 1, %s10
    %p152 = scmp.lt.s32.totalorder %s10, 3
    %p153 = pnand %p151, %p152
    %p154 = pneg %p153
    // Predicated region
    $region9: #{discriminator_mnist_forward.6} parent=5 // pred_check
      _
    $region10: #{discriminator_mnist_forward.6} parent=5 // pred_check_branch
      %156 = sbr.rel (%p153) target = $region12
    $region11: #{discriminator_mnist_forward.6} parent=5 // pred_region
      %s157 = ssub.s32 %s10, 1
      // Predicated region
      $region13: #{discriminator_mnist_forward.6} parent=11 // pred_check
        %p158 = pneg %p73
      $region14: #{discriminator_mnist_forward.6} parent=11 // pred_check_branch
        %160 = sbr.rel (%p158) target = $region16
      $region15: #{discriminator_mnist_forward.6} parent=11 // pred_region
        _
      $region16: #{discriminator_mnist_forward.6} parent=11 // pred_fallthru
        _
      // Predicated region
      $region17: #{discriminator_mnist_forward.6} parent=11 // pred_check
        %p161 = pneg %p94
      $region18: #{discriminator_mnist_forward.6} parent=11 // pred_check_branch
        %163 = sbr.rel (%p161) target = $region20
      $region19: #{discriminator_mnist_forward.6} parent=11 // pred_region
        _
      $region20: #{discriminator_mnist_forward.6} parent=11 // pred_fallthru
        _
      // Predicated region
      $region21: #{discriminator_mnist_forward.6} parent=11 // pred_check
        %p164 = pneg %p115
      $region22: #{discriminator_mnist_forward.6} parent=11 // pred_check_branch
        %166 = sbr.rel (%p164) target = $region24
      $region23: #{discriminator_mnist_forward.6} parent=11 // pred_region
        _
      $region24: #{discriminator_mnist_forward.6} parent=11 // pred_fallthru
        _
    $region12: #{discriminator_mnist_forward.6} parent=5 // pred_fallthru
      _
    %p167 = scmp.lt.s32.totalorder %s10, 2
    // Predicated region
    $region25: #{discriminator_mnist_forward.6} parent=5 // pred_check
      %p168 = pneg %p167
    $region26: #{discriminator_mnist_forward.6} parent=5 // pred_check_branch
      %170 = sbr.rel (%p168) target = $region28
    $region27: #{discriminator_mnist_forward.6} parent=5 // pred_region
      // Predicated region
      $region29: #{discriminator_mnist_forward.6} parent=27 // pred_check
        %p171 = pneg %p46
      $region30: #{discriminator_mnist_forward.6} parent=27 // pred_check_branch
        %173 = sbr.rel (%p171) target = $region32
      $region31: #{discriminator_mnist_forward.6} parent=27 // pred_region
        %s174 = ssub.s32 1, %s17
        %s175 = smul.u32 %s18, %s174
        %p176 = scmp.lt.s32.totalorder %s175, 0
        %s177 = scalar_select %p176, %s175, 0
        %s178 = smul.addr %s177, 4
        %s179 = scalar_lea.vmem %s0, %s178
        %s180 = ssub.s32 1, %s17
        %s181 = smul.u32 %s18, %s180
      $region32: #{discriminator_mnist_forward.6} parent=27 // pred_fallthru
        _
    $region28: #{discriminator_mnist_forward.6} parent=5 // pred_fallthru
      _
    %p182 = scmp.le.s32.totalorder 1, %s10
    %p183 = scmp.lt.s32.totalorder %s10, 3
    %p184 = pnand %p182, %p183
    %p185 = pneg %p184
    // Predicated region
    $region33: #{discriminator_mnist_forward.6} parent=5 // pred_check
      _
    $region34: #{discriminator_mnist_forward.6} parent=5 // pred_check_branch
      %187 = sbr.rel (%p184) target = $region36
    $region35: #{discriminator_mnist_forward.6} parent=5 // pred_region
      %s188 = ssub.s32 %s10, 1
      %s189 = ssub.s32 1, %s19
      %s190 = smul.u32 %s20, %s189
      %p191 = scmp.lt.s32.totalorder %s190, 0
      %s192 = scalar_select %p191, %s190, 0
      %s193 = smul.addr %s192, 4
      %s194 = scalar_lea.vmem %s0, %s193
      %p195 = pneg %p52
      %p196 = pneg %p49
      %p197 = pneg %p73
      %p198 = pneg %p70
      %p199 = pneg %p94
      %p200 = pneg %p91
      %p201 = pneg %p115
      %p202 = pneg %p112
      %p203 = pneg %p143
      %p204 = pneg %p140
      %s205 = smul.u32 %s20, %s19
      %p206 = scmp.lt.s32.totalorder %s205, 0
      %s207 = scalar_select %p206, %s205, 0
      %s208 = smul.addr %s207, 4
      %s209 = scalar_lea.vmem %s4, %s208
      %s210 = ssub.s32 1, %s19
      %s211 = smul.u32 %s20, %s210
      %p212 = scmp.lt.s32.totalorder %s211, 0
      %s213 = scalar_select %p212, %s211, 0
      %s214 = smul.addr %s213, 4
      %s215 = scalar_lea.vmem %s0, %s214
      %s216 = ssub.s32 1, %s19
      %s217 = smul.u32 %s20, %s216
      %s218 = smul.u32 %s20, %s19
      %p219 = scmp.lt.s32.totalorder %s218, 0
      %s220 = scalar_select %p219, %s218, 0
      %s221 = smul.addr %s220, 4
      %s222 = scalar_lea.vmem %s4, %s221
      %s223 = smul.u32 %s20, %s19
      %p225 = scmp.eq.s32.totalorder %s19, 0
      %p226 = scmp.eq.s32.totalorder %s20, 0
      %p227 = pnand %p225, %p226
      %p228 = pneg %p227
      // Predicated region
      $region37: #{discriminator_mnist_forward.6} parent=35 // pred_check
        _
      $region38: #{discriminator_mnist_forward.6} parent=35 // pred_check_branch
        %230 = sbr.rel (%p227) target = $region40
      $region39: #{discriminator_mnist_forward.6} parent=35 // pred_region
        %vm231 = vcmask 7168
        %232 = vst.msk [vmem:[#allocation3] sm:$0xff] %vm231, 0.0
        %233 = vst.msk [vmem:[#allocation3 + $0x8] sm:$0xff] %vm231, 0.0
        %234 = vst.msk [vmem:[#allocation3 + $0x10] sm:$0xff] %vm231, 0.0
        %235 = vst.msk [vmem:[#allocation3 + $0x18] sm:$0xff] %vm231, 0.0
        %236 = vst.msk [vmem:[#allocation4] sm:$0xff] %vm231, 0.0
        %237 = vst.msk [vmem:[#allocation4 + $0x8] sm:$0xff] %vm231, 0.0
        %238 = vst.msk [vmem:[#allocation4 + $0x10] sm:$0xff] %vm231, 0.0
        %239 = vst.msk [vmem:[#allocation4 + $0x18] sm:$0xff] %vm231, 0.0
      $region40: #{discriminator_mnist_forward.6} parent=35 // pred_fallthru
        _
      // Predicated region
      $region41: #{discriminator_mnist_forward.6} parent=35 // pred_check
        %p240 = pneg %p225
      $region42: #{discriminator_mnist_forward.6} parent=35 // pred_check_branch
        %242 = sbr.rel (%p240) target = $region44
      $region43: #{discriminator_mnist_forward.6} parent=35 // pred_region
        %v243 = vld [vmem:[%s1] sm:$0xff]
        %v244 = vld [vmem:[%s1 + $0x8] sm:$0xff]
        %v245 = vld [vmem:[%s1 + $0x10] sm:$0xff]
        %v246 = vld [vmem:[%s1 + $0x18] sm:$0xff]
        %v247 = vld [vmem:[%s215] sm:$0xf]
        %v248 = vld [vmem:[%s215 + $0x4] sm:$0xf]
        %v249 = vld [vmem:[%s215 + $0x8] sm:$0xf]
        %v250 = vld [vmem:[%s215 + $0xc] sm:$0xf]
        %v251 = vld [vmem:[%s215 + $0x10] sm:$0xf]
        %v252 = vld [vmem:[%s215 + $0x14] sm:$0xf]
        %v253 = vld [vmem:[%s215 + $0x18] sm:$0xf]
        %v254 = vld [vmem:[%s215 + $0x1c] sm:$0xf]
        %v255 = vld [vmem:[%s215 + $0x20] sm:$0xf]
        %v256 = vld [vmem:[%s215 + $0x24] sm:$0xf]
        %v257 = vld [vmem:[%s215 + $0x28] sm:$0xf]
        %v258 = vld [vmem:[%s215 + $0x2c] sm:$0xf]
        %v259 = vld [vmem:[%s215 + $0x30] sm:$0xf]
        %v260 = vld [vmem:[%s215 + $0x34] sm:$0xf]
        %v261 = vld [vmem:[%s215 + $0x38] sm:$0xf]
        %v262 = vld [vmem:[%s215 + $0x3c] sm:$0xf]
        %v263 = vld [vmem:[%s215 + $0x40] sm:$0xf]
        %v264 = vld [vmem:[%s215 + $0x44] sm:$0xf]
        %v265 = vld [vmem:[%s215 + $0x48] sm:$0xf]
        %v266 = vld [vmem:[%s215 + $0x4c] sm:$0xf]
        %v267 = vld [vmem:[%s215 + $0x50] sm:$0xf]
        %v268 = vld [vmem:[%s215 + $0x54] sm:$0xf]
        %v269 = vld [vmem:[%s215 + $0x58] sm:$0xf]
        %v270 = vld [vmem:[%s215 + $0x5c] sm:$0xf]
        %v271 = vld [vmem:[%s215 + $0x60] sm:$0xf]
        %v272 = vld [vmem:[%s215 + $0x64] sm:$0xf]
        %v273 = vld [vmem:[%s215 + $0x68] sm:$0xf]
        %v274 = vld [vmem:[%s215 + $0x6c] sm:$0xf]
        %v275 = vld [vmem:[%s215 + $0x70] sm:$0xf]
        %v276 = vld [vmem:[%s215 + $0x74] sm:$0xf]
        %v277 = vld [vmem:[%s215 + $0x78] sm:$0xf]
        %v278 = vld [vmem:[%s215 + $0x7c] sm:$0xf]
        %v283 = vunpack.c.l.b16 %v243
        %v284 = vunpack.c.h.b16 %v243
        %v285 = vunpack.c.l.b16 %v244
        %v286 = vunpack.c.h.b16 %v244
        %v287 = vunpack.c.l.b16 %v245
        %v288 = vunpack.c.h.b16 %v245
        %v289 = vunpack.c.l.b16 %v246
        %v290 = vunpack.c.h.b16 %v246
        %v291 = vpack.c.b16 %v285, %v283
        %v292 = vpack.c.b16 %v286, %v284
        %v293 = vpack.c.b16 %v289, %v287
        %v294 = vpack.c.b16 %v290, %v288
        %v331 = vunpack.c.l.b16 %v247
        %v332 = vunpack.c.l.b16 %v248
        %v333 = vunpack.c.l.b16 %v249
        %v334 = vunpack.c.l.b16 %v250
        %v335 = vunpack.c.l.b16 %v251
        %v336 = vunpack.c.l.b16 %v252
        %v337 = vunpack.c.l.b16 %v253
        %v338 = vunpack.c.l.b16 %v254
        %v339 = vunpack.c.l.b16 %v255
        %v340 = vunpack.c.l.b16 %v256
        %v341 = vunpack.c.l.b16 %v257
        %v342 = vunpack.c.l.b16 %v258
        %v343 = vunpack.c.l.b16 %v259
        %v344 = vunpack.c.l.b16 %v260
        %v345 = vunpack.c.l.b16 %v261
        %v346 = vunpack.c.l.b16 %v262
        %v347 = vunpack.c.l.b16 %v263
        %v348 = vunpack.c.l.b16 %v264
        %v349 = vunpack.c.l.b16 %v265
        %v350 = vunpack.c.l.b16 %v266
        %v351 = vunpack.c.l.b16 %v267
        %v352 = vunpack.c.l.b16 %v268
        %v353 = vunpack.c.l.b16 %v269
        %v354 = vunpack.c.l.b16 %v270
        %v355 = vunpack.c.l.b16 %v271
        %v356 = vunpack.c.l.b16 %v272
        %v357 = vunpack.c.l.b16 %v273
        %v358 = vunpack.c.l.b16 %v274
        %v359 = vunpack.c.l.b16 %v275
        %v360 = vunpack.c.l.b16 %v276
        %v361 = vunpack.c.l.b16 %v277
        %v362 = vunpack.c.l.b16 %v278
        %v363 = vpack.c.b16 %v332, %v331
        %v364 = vpack.c.b16 %v334, %v333
        %v365 = vpack.c.b16 %v336, %v335
        %v366 = vpack.c.b16 %v338, %v337
        %v367 = vpack.c.b16 %v340, %v339
        %v368 = vpack.c.b16 %v342, %v341
        %v369 = vpack.c.b16 %v344, %v343
        %v370 = vpack.c.b16 %v346, %v345
        %v371 = vpack.c.b16 %v348, %v347
        %v372 = vpack.c.b16 %v350, %v349
        %v373 = vpack.c.b16 %v352, %v351
        %v374 = vpack.c.b16 %v354, %v353
        %v375 = vpack.c.b16 %v356, %v355
        %v376 = vpack.c.b16 %v358, %v357
        %v377 = vpack.c.b16 %v360, %v359
        %v378 = vpack.c.b16 %v362, %v361
        %395 = vmatprep.subr.bf16.mxu0 0
        %396 = vmatpush1.bf16.msra.mxu0 %v363
        %397 = vmatprep.subr.bf16.mxu0 0
        %398 = vmatpush1.bf16.msra.mxu0 %v364
        %399 = vmatprep.subr.bf16.mxu0 0
        %400 = vmatpush1.bf16.msra.mxu0 %v365
        %401 = vmatprep.subr.bf16.mxu0 0
        %402 = vmatpush1.bf16.msra.mxu0 %v366
        %403 = vmatprep.subr.bf16.mxu0 0
        %404 = vmatpush1.bf16.msra.mxu0 %v367
        %405 = vmatprep.subr.bf16.mxu0 0
        %406 = vmatpush1.bf16.msra.mxu0 %v368
        %407 = vmatprep.subr.bf16.mxu0 0
        %408 = vmatpush1.bf16.msra.mxu0 %v369
        %409 = vmatprep.subr.bf16.mxu0 0
        %410 = vmatpush1.bf16.msra.mxu0 %v370
        %411 = vmatprep.subr.bf16.mxu0 0
        %412 = vmatpush1.bf16.msra.mxu0 %v371
        %413 = vmatprep.subr.bf16.mxu0 0
        %414 = vmatpush1.bf16.msra.mxu0 %v372
        %415 = vmatprep.subr.bf16.mxu0 0
        %416 = vmatpush1.bf16.msra.mxu0 %v373
        %417 = vmatprep.subr.bf16.mxu0 0
        %418 = vmatpush1.bf16.msra.mxu0 %v374
        %419 = vmatprep.subr.bf16.mxu0 0
        %420 = vmatpush1.bf16.msra.mxu0 %v375
        %421 = vmatprep.subr.bf16.mxu0 0
        %422 = vmatpush1.bf16.msra.mxu0 %v376
        %423 = vmatprep.subr.bf16.mxu0 0
        %424 = vmatpush1.bf16.msra.mxu0 %v377
        %425 = vmatprep.subr.bf16.mxu0 0
        %426 = vmatpush1.bf16.msra.mxu0 %v378
        %427 = vmatprep.mubr.bf16.mxu0 %v292
        %428 = vmatmul.mubr.bf16.gmra.mrb[0].mxu0 %v291
        %v429 = vpop.f32.mrb[0].mxu0
        %v430 = vadd.f32 0.0, %v429
        %v431 = vpop.f32.mrb[0].mxu0
        %v432 = vpop.f32.mrb[0].mxu0
        %v433 = vadd.f32 0.0, %v432
        %v434 = vpop.f32.mrb[0].mxu0
        %435 = vmatprep.mubr.bf16.mxu0 %v294
        %436 = vmatmul.mubr.bf16.gmra.mrb[0].mxu0 %v293
        %v437 = vpop.f32.mrb[0].mxu0
        %v438 = vadd.f32 0.0, %v437
        %v439 = vpop.f32.mrb[0].mxu0
        %v440 = vpop.f32.mrb[0].mxu0
        %v441 = vadd.f32 0.0, %v440
        %v442 = vpop.f32.mrb[0].mxu0
        %443 = vdwg.mxu0
        %s444 = smul.u32 %s20, 32
        %s445 = scalar_lea.vmem [#allocation2], %s444
        %vm446 = vcmask 146432
        %447 = vst.msk [vmem:[%s445] sm:$0xff] %vm446, %v430
        %448 = vst.msk [vmem:[%s445 + $0x8] sm:$0xff] %vm446, %v433
        %449 = vst.msk [vmem:[%s445 + $0x10] sm:$0xff] %vm446, %v438
        %450 = vst.msk [vmem:[%s445 + $0x18] sm:$0xff] %vm446, %v441
        %v451 = vld [vmem:[#allocation3] sm:$0xff]
        %v452 = vld [vmem:[#allocation3 + $0x8] sm:$0xff]
        %v453 = vld [vmem:[#allocation3 + $0x10] sm:$0xff]
        %v454 = vld [vmem:[#allocation3 + $0x18] sm:$0xff]
        %v455 = vsel %vm446, %v430, 0.0
        %456 = vadd.xlane.f32.xlu0 %v455
        %v457 = vpop.xlane.xlu0 %456
        %v458 = vsel %vm446, %v433, 0.0
        %459 = vadd.xlane.f32.xlu0 %v458
        %v460 = vpop.xlane.xlu0 %459
        %v461 = vsel %vm446, %v438, 0.0
        %462 = vadd.xlane.f32.xlu0 %v461
        %v463 = vpop.xlane.xlu0 %462
        %v464 = vsel %vm446, %v441, 0.0
        %465 = vadd.xlane.f32.xlu0 %v464
        %v466 = vpop.xlane.xlu0 %465
        %v467 = vadd.f32 %v451, %v457
        %v468 = vadd.f32 %v452, %v460
        %v469 = vadd.f32 %v453, %v463
        %v470 = vadd.f32 %v454, %v466
        %vm471 = vcmask 7168
        %472 = vst.msk [vmem:[#allocation3] sm:$0xff] %vm471, %v467
        %473 = vst.msk [vmem:[#allocation3 + $0x8] sm:$0xff] %vm471, %v468
        %474 = vst.msk [vmem:[#allocation3 + $0x10] sm:$0xff] %vm471, %v469
        %475 = vst.msk [vmem:[#allocation3 + $0x18] sm:$0xff] %vm471, %v470
        %v476 = vld [vmem:[#allocation4] sm:$0xff]
        %v477 = vld [vmem:[#allocation4 + $0x8] sm:$0xff]
        %v478 = vld [vmem:[#allocation4 + $0x10] sm:$0xff]
        %v479 = vld [vmem:[#allocation4 + $0x18] sm:$0xff]
        %v480 = vmul.f32 %v430, %v430
        %v481 = vmul.f32 %v433, %v433
        %v482 = vmul.f32 %v438, %v438
        %v483 = vmul.f32 %v441, %v441
        %v484 = vsel %vm446, %v480, 0.0
        %485 = vadd.xlane.f32.xlu0 %v484
        %v486 = vpop.xlane.xlu0 %485
        %v487 = vsel %vm446, %v481, 0.0
        %488 = vadd.xlane.f32.xlu0 %v487
        %v489 = vpop.xlane.xlu0 %488
        %v490 = vsel %vm446, %v482, 0.0
        %491 = vadd.xlane.f32.xlu0 %v490
        %v492 = vpop.xlane.xlu0 %491
        %v493 = vsel %vm446, %v483, 0.0
        %494 = vadd.xlane.f32.xlu0 %v493
        %v495 = vpop.xlane.xlu0 %494
        %v496 = vadd.f32 %v476, %v486
        %v497 = vadd.f32 %v477, %v489
        %v498 = vadd.f32 %v478, %v492
        %v499 = vadd.f32 %v479, %v495
        %500 = vst.msk [vmem:[#allocation4] sm:$0xff] %vm471, %v496
        %501 = vst.msk [vmem:[#allocation4 + $0x8] sm:$0xff] %vm471, %v497
        %502 = vst.msk [vmem:[#allocation4 + $0x10] sm:$0xff] %vm471, %v498
        %503 = vst.msk [vmem:[#allocation4 + $0x18] sm:$0xff] %vm471, %v499
      $region44: #{discriminator_mnist_forward.6} parent=35 // pred_fallthru
        _
      %p504 = scmp.eq.s32.totalorder %s19, 1
      // Predicated region
      $region45: #{discriminator_mnist_forward.6} parent=35 // pred_check
        %p505 = pneg %p504
      $region46: #{discriminator_mnist_forward.6} parent=35 // pred_check_branch
        %507 = sbr.rel (%p505) target = $region48
      $region47: #{discriminator_mnist_forward.6} parent=35 // pred_region
        %v508 = vld [vmem:[#allocation3] sm:$0xff]
        %v509 = vld [vmem:[#allocation3 + $0x8] sm:$0xff]
        %v510 = vld [vmem:[#allocation3 + $0x10] sm:$0xff]
        %v511 = vld [vmem:[#allocation3 + $0x18] sm:$0xff]
        %v512 = vmul.f32 %v508, 0.055555556
        %v513 = vmul.f32 %v509, 0.055555556
        %v514 = vmul.f32 %v510, 0.055555556
        %v515 = vmul.f32 %v511, 0.055555556
        %v516 = vld [vmem:[#allocation4] sm:$0xff]
        %v517 = vld [vmem:[#allocation4 + $0x8] sm:$0xff]
        %v518 = vld [vmem:[#allocation4 + $0x10] sm:$0xff]
        %v519 = vld [vmem:[#allocation4 + $0x18] sm:$0xff]
        %v520 = vmul.f32 %v516, 0.055555556
        %v521 = vmul.f32 %v517, 0.055555556
        %v522 = vmul.f32 %v518, 0.055555556
        %v523 = vmul.f32 %v519, 0.055555556
        %v524 = vmul.f32 %v512, %v512
        %v525 = vmul.f32 %v513, %v513
        %v526 = vmul.f32 %v514, %v514
        %v527 = vmul.f32 %v515, %v515
        %v528 = vsub.f32 %v520, %v524
        %v529 = vsub.f32 %v521, %v525
        %v530 = vsub.f32 %v522, %v526
        %v531 = vsub.f32 %v523, %v527
        %v532 = vmax.f32 %v528, 0.0
        %v533 = vmax.f32 %v529, 0.0
        %v534 = vmax.f32 %v530, 0.0
        %v535 = vmax.f32 %v531, 0.0
        %s536 = smul.u32 %s20, 32
        %s537 = scalar_lea.vmem [#allocation2], %s536
        %v538 = vld [vmem:[%s537] sm:$0xff]
        %v539 = vld [vmem:[%s537 + $0x8] sm:$0xff]
        %v540 = vld [vmem:[%s537 + $0x10] sm:$0xff]
        %v541 = vld [vmem:[%s537 + $0x18] sm:$0xff]
        %543 = vset.pattern.permute.xlu0 0
        %544 = vperm.xlu0 %543, %v512
        %v545 = vpop.permute.xlu0 %544
        %548 = vset.pattern.permute.xlu0 0
        %549 = vperm.xlu0 %548, %v513
        %v550 = vpop.permute.xlu0 %549
        %553 = vset.pattern.permute.xlu0 0
        %554 = vperm.xlu0 %553, %v514
        %v555 = vpop.permute.xlu0 %554
        %558 = vset.pattern.permute.xlu0 0
        %559 = vperm.xlu0 %558, %v515
        %v560 = vpop.permute.xlu0 %559
        %v562 = vsub.f32 %v538, %v545
        %v563 = vsub.f32 %v539, %v550
        %v564 = vsub.f32 %v540, %v555
        %v565 = vsub.f32 %v541, %v560
        %v566 = vadd.f32 %v532, 1e-05
        %v567 = vadd.f32 %v533, 1e-05
        %v568 = vadd.f32 %v534, 1e-05
        %v569 = vadd.f32 %v535, 1e-05
        %v570 = vrsqrt.pop %v566
        %v571 = vrsqrt.pop %v567
        %v572 = vrsqrt.pop %v568
        %v573 = vrsqrt.pop %v569
        %575 = vset.pattern.permute.xlu0 0
        %576 = vperm.xlu0 %575, %v570
        %v577 = vpop.permute.xlu0 %576
        %580 = vset.pattern.permute.xlu0 0
        %581 = vperm.xlu0 %580, %v571
        %v582 = vpop.permute.xlu0 %581
        %585 = vset.pattern.permute.xlu0 0
        %586 = vperm.xlu0 %585, %v572
        %v587 = vpop.permute.xlu0 %586
        %590 = vset.pattern.permute.xlu0 0
        %591 = vperm.xlu0 %590, %v573
        %v592 = vpop.permute.xlu0 %591
        %v594 = vmul.f32 %v562, %v577
        %v595 = vmul.f32 %v563, %v582
        %v596 = vmul.f32 %v564, %v587
        %v597 = vmul.f32 %v565, %v592
        %v598 = vld [vmem:[%s2] sm:$0xff]
        %v599 = vld [vmem:[%s2 + $0x8] sm:$0xff]
        %v600 = vld [vmem:[%s2 + $0x10] sm:$0xff]
        %v601 = vld [vmem:[%s2 + $0x18] sm:$0xff]
        %603 = vset.pattern.permute.xlu0 0
        %604 = vperm.xlu0 %603, %v598
        %v605 = vpop.permute.xlu0 %604
        %608 = vset.pattern.permute.xlu0 0
        %609 = vperm.xlu0 %608, %v599
        %v610 = vpop.permute.xlu0 %609
        %613 = vset.pattern.permute.xlu0 0
        %614 = vperm.xlu0 %613, %v600
        %v615 = vpop.permute.xlu0 %614
        %618 = vset.pattern.permute.xlu0 0
        %619 = vperm.xlu0 %618, %v601
        %v620 = vpop.permute.xlu0 %619
        %v622 = vmul.f32 %v594, %v605
        %v623 = vmul.f32 %v595, %v610
        %v624 = vmul.f32 %v596, %v615
        %v625 = vmul.f32 %v597, %v620
        %v626 = vld [vmem:[%s3] sm:$0xff]
        %v627 = vld [vmem:[%s3 + $0x8] sm:$0xff]
        %v628 = vld [vmem:[%s3 + $0x10] sm:$0xff]
        %v629 = vld [vmem:[%s3 + $0x18] sm:$0xff]
        %631 = vset.pattern.permute.xlu0 0
        %632 = vperm.xlu0 %631, %v626
        %v633 = vpop.permute.xlu0 %632
        %636 = vset.pattern.permute.xlu0 0
        %637 = vperm.xlu0 %636, %v627
        %v638 = vpop.permute.xlu0 %637
        %641 = vset.pattern.permute.xlu0 0
        %642 = vperm.xlu0 %641, %v628
        %v643 = vpop.permute.xlu0 %642
        %646 = vset.pattern.permute.xlu0 0
        %647 = vperm.xlu0 %646, %v629
        %v648 = vpop.permute.xlu0 %647
        %v650 = vadd.f32 %v622, %v633
        %v651 = vadd.f32 %v623, %v638
        %v652 = vadd.f32 %v624, %v643
        %v653 = vadd.f32 %v625, %v648
        %vm654 = vcmp.ge.f32.partialorder %v650, 0.0
        %vm655 = vcmp.ge.f32.partialorder %v651, 0.0
        %vm656 = vcmp.ge.f32.partialorder %v652, 0.0
        %vm657 = vcmp.ge.f32.partialorder %v653, 0.0
        %v658 = vmul.f32 %v650, 0.2
        %v659 = vmul.f32 %v651, 0.2
        %v660 = vmul.f32 %v652, 0.2
        %v661 = vmul.f32 %v653, 0.2
        %v662 = vsel %vm654, %v650, %v658
        %v663 = vsel %vm655, %v651, %v659
        %v664 = vsel %vm656, %v652, %v660
        %v665 = vsel %vm657, %v653, %v661
        %v666 = vpack.c.bf16 %v663, %v662
        %v667 = vpack.c.bf16 %v665, %v664
        %v670 = vunpack.c.l.b16 %v666
        %v671 = vunpack.c.h.b16 %v666
        %v672 = vunpack.c.l.b16 %v667
        %v673 = vunpack.c.h.b16 %v667
        %v674 = vpack.c.b16 %v670, %v670
        %v675 = vpack.c.b16 %v671, %v671
        %v676 = vpack.c.b16 %v672, %v672
        %v677 = vpack.c.b16 %v673, %v673
        %vm682 = vcmask 142336
        %683 = vst.msk [vmem:[%s222] sm:$0xf] %vm682, %v674
        %684 = vst.msk [vmem:[%s222 + $0x4] sm:$0xf] %vm682, %v675
        %685 = vst.msk [vmem:[%s222 + $0x8] sm:$0xf] %vm682, %v676
        %686 = vst.msk [vmem:[%s222 + $0xc] sm:$0xf] %vm682, %v677
      $region48: #{discriminator_mnist_forward.6} parent=35 // pred_fallthru
        _
      %s687 = smul.u32 %s20, %s19
      %p688 = scmp.lt.s32.totalorder %s687, 0
      %s689 = scalar_select %p688, %s687, 0
      %s690 = smul.addr %s689, 4
      %s691 = scalar_lea.vmem %s4, %s690
      // Predicated region
      $region49: #{discriminator_mnist_forward.6} parent=35 // pred_check
        %p692 = pneg %p140
      $region50: #{discriminator_mnist_forward.6} parent=35 // pred_check_branch
        %694 = sbr.rel (%p692) target = $region52
      $region51: #{discriminator_mnist_forward.6} parent=35 // pred_region
        %s695 = smul.u32 %s20, %s19
      $region52: #{discriminator_mnist_forward.6} parent=35 // pred_fallthru
        _
    $region36: #{discriminator_mnist_forward.6} parent=5 // pred_fallthru
      _
    %p696 = scmp.le.s32.totalorder 2, %s10
    // Predicated region
    $region53: #{discriminator_mnist_forward.6} parent=5 // pred_check
      %p697 = pneg %p696
    $region54: #{discriminator_mnist_forward.6} parent=5 // pred_check_branch
      %699 = sbr.rel (%p697) target = $region56
    $region55: #{discriminator_mnist_forward.6} parent=5 // pred_region
      %s700 = ssub.s32 %s10, 2
      // Predicated region
      $region57: #{discriminator_mnist_forward.6} parent=55 // pred_check
        %p701 = pneg %p146
      $region58: #{discriminator_mnist_forward.6} parent=55 // pred_check_branch
        %703 = sbr.rel (%p701) target = $region60
      $region59: #{discriminator_mnist_forward.6} parent=55 // pred_region
        %s704 = smul.u32 %s22, %s21
        %p705 = scmp.lt.s32.totalorder %s704, 0
        %s706 = scalar_select %p705, %s704, 0
        %s707 = smul.addr %s706, 4
        %s708 = scalar_lea.vmem %s4, %s707
      $region60: #{discriminator_mnist_forward.6} parent=55 // pred_fallthru
        _
    $region56: #{discriminator_mnist_forward.6} parent=5 // pred_fallthru
      _
  $region6: #{discriminator_mnist_forward.6} parent=0 // loop_footer
    %s14 = sadd.s32 1, %s10
  $region7: #{discriminator_mnist_forward.6} parent=0 // loop_footer_branch
    %9 = sbr.rel target = $region3
  $region8: #{discriminator_mnist_forward.6} parent=0 // loop_exit
    _

</llo_original>
